<compile_context>
chip_gen: v7x
topology: tpu7x:2x2x1
jax: 0.10.0
libtpu: 0.0.40
codegen_flags: <defaults>
</compile_context>

<pallas_src>
import functools

import jax
import jax.numpy as jnp
from jax.experimental import pallas as pl
from jax.experimental.pallas import tpu as pltpu

NET_W = 512
OBS_PAD = 128     # fc1 K dim padded to a clean lane tile (zero rows in w1)
OUT_PAD = 128     # action dim padded so the output store is lane-dense


def policy_kernel(s_ref, w1_ref, b1_ref, w2_ref, b2_ref, w5_ref, b5_ref, out_ref,
                  *, bf16_epilogue):
    # One (tile_b, OBS_PAD) batch tile through the whole MLP; weights are VMEM
    # resident (constant block index) so only s/out move per grid step.
    x = s_ref[...]                                                     # bf16
    h1 = jnp.dot(x, w1_ref[...], preferred_element_type=jnp.float32)  # MXU, f32 acc
    if bf16_epilogue:
        # bf16 VPU path (v6e/v7x): cast acc once, add/relu in packed bf16.
        h1 = jnp.maximum(h1.astype(jnp.bfloat16) + b1_ref[...].astype(jnp.bfloat16), 0.0)
    else:
        # v5e: no bf16 VPU, keep the f32 epilogue then cast for the next MXU op.
        h1 = jnp.maximum(h1 + b1_ref[...], 0.0).astype(jnp.bfloat16)

    h2 = jnp.dot(h1, w2_ref[...], preferred_element_type=jnp.float32)
    if bf16_epilogue:
        h2 = jnp.maximum(h2.astype(jnp.bfloat16) + b2_ref[...].astype(jnp.bfloat16), 0.0)
    else:
        h2 = jnp.maximum(h2 + b2_ref[...], 0.0).astype(jnp.bfloat16)   # bn2 = Identity

    y = jnp.dot(h2, w5_ref[...], preferred_element_type=jnp.float32)
    # f32 add + tanh (EUP), bf16 lane-dense store (halves output writeback).
    out_ref[...] = jnp.tanh(y + b5_ref[...]).astype(out_ref.dtype)


@functools.partial(jax.jit,
                   static_argnames=("action_count", "tile_b", "bf16_epilogue"))
def _policy_pallas(s, kernel_params, action_count, tile_b, bf16_epilogue):
    """s: (batch, obs_count) f32 -> (batch, action_count) f32."""
    w1, b1, w2, b2, w5, b5 = kernel_params
    batch, obs = s.shape

    num_tiles = (batch + tile_b - 1) // tile_b
    batch_pad = num_tiles * tile_b

    # Single pad (no zeros+dynamic-update-slice): cast once, pad batch & obs.
    s_p = jnp.pad(s.astype(jnp.bfloat16),
                  ((0, batch_pad - batch), (0, OBS_PAD - obs)))

    full = lambda arr: pl.BlockSpec(arr.shape, lambda i: (0, 0))

    out_pad = pl.pallas_call(
        functools.partial(policy_kernel, bf16_epilogue=bf16_epilogue),
        out_shape=jax.ShapeDtypeStruct((batch_pad, OUT_PAD), jnp.bfloat16),
        grid=(num_tiles,),
        in_specs=[
            pl.BlockSpec((tile_b, OBS_PAD), lambda i: (i, 0)),   # s: tiled on batch
            full(w1), full(b1),                                  # weights: VMEM-resident
            full(w2), full(b2),
            full(w5), full(b5),
        ],
        out_specs=pl.BlockSpec((tile_b, OUT_PAD), lambda i: (i, 0)),
        compiler_params=pltpu.CompilerParams(
            dimension_semantics=("parallel",),                   # megacore sharding
        ),
    )(s_p, w1, b1, w2, b2, w5, b5)

    return out_pad[:batch, :action_count].astype(jnp.float32)


def _device_flags():
    kind = jax.devices()[0].device_kind.lower()
    return ("v5" in kind), ("v6" in kind)      # (is_v5, is_v6)


def _pick_tile(batch, is_v5, is_v6):
    """Generation- and batch-aware batch tile (static per compilation)."""
    if batch <= 128:
        # Small/rollout batches: one tile, batch padded only to the bf16
        # sublane pack (16) instead of a full 128-row tile.
        return max(16, 16 * ((batch + 15) // 16))
    if is_v5:
        return 128                              # native M for the 4x128^2 MXU
    if is_v6:
        return 512 if batch >= 1024 else 256    # match the 256-wide MXU tile
    # v7x (and newer): 256-wide MXU, but keep >= 2 tiles so both TensorCores work.
    return 256 if batch >= 512 else 128


def policy_forward(s, kernel_params, action_count):
    is_v5, is_v6 = _device_flags()
    tile_b = _pick_tile(s.shape[0], is_v5, is_v6)
    bf16_epilogue = not is_v5                   # bf16 VPU exists on v6e/v7x only
    return _policy_pallas(s, kernel_params, action_count,
                          tile_b=tile_b, bf16_epilogue=bf16_epilogue)


def init_params(key, obs_count, action_count):
    """PyTorch-style Linear init: U(-1/sqrt(fan_in), 1/sqrt(fan_in)).

    Returns (master_f32, kernel_params): unpadded f32 weights (transposed to
    (in, out)) for the reference, plus padded bf16/f32 operands built once at
    init time for the kernel.
    """
    def linear(k, fan_in, fan_out):
        kw, kb = jax.random.split(k)
        bound = 1.0 / jnp.sqrt(fan_in)
        w = jax.random.uniform(kw, (fan_in, fan_out), jnp.float32, -bound, bound)
        b = jax.random.uniform(kb, (1, fan_out), jnp.float32, -bound, bound)
        return w, b

    k1, k2, k5 = jax.random.split(key, 3)
    w1, b1 = linear(k1, obs_count, NET_W)          # fc1: obs -> 512
    w2, b2 = linear(k2, NET_W, NET_W // 2)         # fc2: 512 -> 256
    w5, b5 = linear(k5, NET_W // 2, action_count)  # fc5: 256 -> action_count
    master = (w1, b1, w2, b2, w5, b5)

    # Kernel operands: pad obs/action dims once, cast MXU operands to bf16,
    # keep biases in f32 (kernel casts them for the bf16 epilogue path).
    w1_p = jnp.zeros((OBS_PAD, NET_W), jnp.float32).at[:obs_count].set(w1)
    w5_p = jnp.zeros((NET_W // 2, OUT_PAD), jnp.float32).at[:, :action_count].set(w5)
    b5_p = jnp.zeros((1, OUT_PAD), jnp.float32).at[:, :action_count].set(b5)
    kernel_params = (
        w1_p.astype(jnp.bfloat16), b1,
        w2.astype(jnp.bfloat16), b2,
        w5_p.astype(jnp.bfloat16), b5_p,
    )
    return master, kernel_params


def reference_forward(s, master):
    w1, b1, w2, b2, w5, b5 = master
    h1 = jnp.maximum(s @ w1 + b1, 0.0)
    h2 = jnp.maximum(h1 @ w2 + b2, 0.0)
    return jnp.tanh(h2 @ w5 + b5)


if __name__ == "__main__":
    # BipedalWalker-style dims: obs_count=24, action_count=4.
    obs_count, action_count = 24, 4

    key = jax.random.PRNGKey(0)
    k_params, k_s1, k_s2 = jax.random.split(key, 3)
    master, kernel_params = init_params(k_params, obs_count, action_count)

    # bf16 MXU operands + bf16 epilogue/output vs the f32 reference: tanh
    # output is bounded, so a loose elementwise tolerance is appropriate.
    TOL = 5e-2

    # Training-sized batch: exercises the tiled grid (2 tiles on v5e/v7x,
    # 1 full 256-row tile on v6e).
    batch = 256
    s = jax.random.normal(k_s1, (batch, obs_count), jnp.float32)
    out = jax.block_until_ready(policy_forward(s, kernel_params, action_count))
    ref = reference_forward(s, master)
    assert out.shape == (batch, action_count), out.shape
    err = float(jnp.max(jnp.abs(out - ref)))
    assert err < TOL, f"mismatch vs reference (batch={batch}), max abs err {err}"

    # Rollout-sized batch: exercises the small-batch path (single 16-row tile).
    batch_small = 8
    s_small = jax.random.normal(k_s2, (batch_small, obs_count), jnp.float32)
    out_small = jax.block_until_ready(
        policy_forward(s_small, kernel_params, action_count))
    ref_small = reference_forward(s_small, master)
    assert out_small.shape == (batch_small, action_count), out_small.shape
    err_small = float(jnp.max(jnp.abs(out_small - ref_small)))
    assert err_small < TOL, (
        f"mismatch vs reference (batch={batch_small}), max abs err {err_small}")

    print("KERNEL_OK")
</pallas_src>

<mosaic_0001>
module attributes {stable_mosaic.version = 11 : i64} {
  func.func @policy_kernel(%arg0: i32, %arg1: memref<128x128xbf16, #tpu.memory_space<vmem>>, %arg2: memref<128x512xbf16, #tpu.memory_space<vmem>>, %arg3: memref<1x512xf32, #tpu.memory_space<vmem>>, %arg4: memref<512x256xbf16, #tpu.memory_space<vmem>>, %arg5: memref<1x256xf32, #tpu.memory_space<vmem>>, %arg6: memref<256x128xbf16, #tpu.memory_space<vmem>>, %arg7: memref<1x128xf32, #tpu.memory_space<vmem>>, %arg8: memref<128x128xbf16, #tpu.memory_space<vmem>>) attributes {dimension_semantics = [#tpu.dimension_semantics<parallel>], iteration_bounds = array<i64: 2>, scalar_prefetch = 0 : i64, scratch_operands = 0 : i64, tpu.core_type = #tpu.core_type<tc>, window_params = [{transform_indices = @transform_0, window_bounds = array<i64: 128, 128>}, {pipeline_mode = #tpu.pipeline_mode<synchronous>, transform_indices = @transform_1, window_bounds = array<i64: 128, 512>}, {pipeline_mode = #tpu.pipeline_mode<synchronous>, transform_indices = @transform_2, window_bounds = array<i64: 1, 512>}, {pipeline_mode = #tpu.pipeline_mode<synchronous>, transform_indices = @transform_3, window_bounds = array<i64: 512, 256>}, {pipeline_mode = #tpu.pipeline_mode<synchronous>, transform_indices = @transform_4, window_bounds = array<i64: 1, 256>}, {pipeline_mode = #tpu.pipeline_mode<synchronous>, transform_indices = @transform_5, window_bounds = array<i64: 256, 128>}, {pipeline_mode = #tpu.pipeline_mode<synchronous>, transform_indices = @transform_6, window_bounds = array<i64: 1, 128>}, {transform_indices = @transform_7, window_bounds = array<i64: 128, 128>}]} {
    %c0 = arith.constant 0 : index
    %c0_0 = arith.constant 0 : index
    %0 = vector.load %arg1[%c0, %c0_0] : memref<128x128xbf16, #tpu.memory_space<vmem>>, vector<128x128xbf16>
    %c0_1 = arith.constant 0 : index
    %c0_2 = arith.constant 0 : index
    %1 = vector.load %arg2[%c0_1, %c0_2] : memref<128x512xbf16, #tpu.memory_space<vmem>>, vector<128x512xbf16>
    %cst = arith.constant dense<0.000000e+00> : vector<128x512xf32>
    %2 = tpu.matmul %0, %1, %cst {dimension_numbers = #tpu.dot_dimension_numbers<[1], [0], [0], [1], [0, 0, 1, 1], [], []>} : vector<128x128xbf16>, vector<128x512xbf16>, vector<128x512xf32> -> vector<128x512xf32>
    %3 = arith.truncf %2 : vector<128x512xf32> to vector<128x512xbf16>
    %c0_3 = arith.constant 0 : index
    %c0_4 = arith.constant 0 : index
    %4 = vector.load %arg3[%c0_3, %c0_4] : memref<1x512xf32, #tpu.memory_space<vmem>>, vector<1x512xf32>
    %5 = arith.truncf %4 : vector<1x512xf32> to vector<1x512xbf16>
    %6 = vector.broadcast %5 : vector<1x512xbf16> to vector<128x512xbf16>
    %7 = arith.addf %3, %6 : vector<128x512xbf16>
    %cst_5 = arith.constant 0.000000e+00 : bf16
    %8 = vector.broadcast %cst_5 : bf16 to vector<128x512xbf16>
    %9 = arith.maximumf %7, %8 : vector<128x512xbf16>
    %c0_6 = arith.constant 0 : index
    %c0_7 = arith.constant 0 : index
    %10 = vector.load %arg4[%c0_6, %c0_7] : memref<512x256xbf16, #tpu.memory_space<vmem>>, vector<512x256xbf16>
    %cst_8 = arith.constant dense<0.000000e+00> : vector<128x256xf32>
    %11 = tpu.matmul %9, %10, %cst_8 {dimension_numbers = #tpu.dot_dimension_numbers<[1], [0], [0], [1], [0, 0, 1, 1], [], []>} : vector<128x512xbf16>, vector<512x256xbf16>, vector<128x256xf32> -> vector<128x256xf32>
    %12 = arith.truncf %11 : vector<128x256xf32> to vector<128x256xbf16>
    %c0_9 = arith.constant 0 : index
    %c0_10 = arith.constant 0 : index
    %13 = vector.load %arg5[%c0_9, %c0_10] : memref<1x256xf32, #tpu.memory_space<vmem>>, vector<1x256xf32>
    %14 = arith.truncf %13 : vector<1x256xf32> to vector<1x256xbf16>
    %15 = vector.broadcast %14 : vector<1x256xbf16> to vector<128x256xbf16>
    %16 = arith.addf %12, %15 : vector<128x256xbf16>
    %cst_11 = arith.constant 0.000000e+00 : bf16
    %17 = vector.broadcast %cst_11 : bf16 to vector<128x256xbf16>
    %18 = arith.maximumf %16, %17 : vector<128x256xbf16>
    %c0_12 = arith.constant 0 : index
    %c0_13 = arith.constant 0 : index
    %19 = vector.load %arg6[%c0_12, %c0_13] : memref<256x128xbf16, #tpu.memory_space<vmem>>, vector<256x128xbf16>
    %cst_14 = arith.constant dense<0.000000e+00> : vector<128x128xf32>
    %20 = tpu.matmul %18, %19, %cst_14 {dimension_numbers = #tpu.dot_dimension_numbers<[1], [0], [0], [1], [0, 0, 1, 1], [], []>} : vector<128x256xbf16>, vector<256x128xbf16>, vector<128x128xf32> -> vector<128x128xf32>
    %c0_15 = arith.constant 0 : index
    %c0_16 = arith.constant 0 : index
    %21 = vector.load %arg7[%c0_15, %c0_16] : memref<1x128xf32, #tpu.memory_space<vmem>>, vector<1x128xf32>
    %22 = vector.broadcast %21 : vector<1x128xf32> to vector<128x128xf32>
    %23 = arith.addf %20, %22 : vector<128x128xf32>
    %24 = math.tanh %23 : vector<128x128xf32>
    %25 = arith.truncf %24 : vector<128x128xf32> to vector<128x128xbf16>
    %c0_17 = arith.constant 0 : index
    %c0_18 = arith.constant 0 : index
    %26 = vector.load %arg8[%c0_17, %c0_18] : memref<128x128xbf16, #tpu.memory_space<vmem>>, vector<128x128xbf16>
    tpu.vector_store %arg8[%c0_17, %c0_18], %25 {strides = array<i32>} : memref<128x128xbf16, #tpu.memory_space<vmem>>, vector<128x128xbf16>,
    return
  }
  func.func @transform_0(%arg0: i32) -> (i32, i32) {
    %c0_i32 = arith.constant 0 : i32
    %c0_i32_0 = arith.constant 0 : i32
    return %arg0, %c0_i32 : i32, i32
  }
  func.func @transform_1(%arg0: i32) -> (i32, i32) {
    %c0_i32 = arith.constant 0 : i32
    %c0_i32_0 = arith.constant 0 : i32
    %c0_i32_1 = arith.constant 0 : i32
    return %c0_i32, %c0_i32_0 : i32, i32
  }
  func.func @transform_2(%arg0: i32) -> (i32, i32) {
    %c0_i32 = arith.constant 0 : i32
    %c0_i32_0 = arith.constant 0 : i32
    %c0_i32_1 = arith.constant 0 : i32
    return %c0_i32, %c0_i32_0 : i32, i32
  }
  func.func @transform_3(%arg0: i32) -> (i32, i32) {
    %c0_i32 = arith.constant 0 : i32
    %c0_i32_0 = arith.constant 0 : i32
    %c0_i32_1 = arith.constant 0 : i32
    return %c0_i32, %c0_i32_0 : i32, i32
  }
  func.func @transform_4(%arg0: i32) -> (i32, i32) {
    %c0_i32 = arith.constant 0 : i32
    %c0_i32_0 = arith.constant 0 : i32
    %c0_i32_1 = arith.constant 0 : i32
    return %c0_i32, %c0_i32_0 : i32, i32
  }
  func.func @transform_5(%arg0: i32) -> (i32, i32) {
    %c0_i32 = arith.constant 0 : i32
    %c0_i32_0 = arith.constant 0 : i32
    %c0_i32_1 = arith.constant 0 : i32
    return %c0_i32, %c0_i32_0 : i32, i32
  }
  func.func @transform_6(%arg0: i32) -> (i32, i32) {
    %c0_i32 = arith.constant 0 : i32
    %c0_i32_0 = arith.constant 0 : i32
    %c0_i32_1 = arith.constant 0 : i32
    return %c0_i32, %c0_i32_0 : i32, i32
  }
  func.func @transform_7(%arg0: i32) -> (i32, i32) {
    %c0_i32 = arith.constant 0 : i32
    %c0_i32_0 = arith.constant 0 : i32
    return %arg0, %c0_i32 : i32, i32
  }
}

</mosaic_0001>

<llo_original>
// kernel: _policy_pallas.1
$region0: #{_policy_pallas.1}
  #allocation0 [shape = 'u32[]', space=smem, size = 0x4, offset = 0x4, fixed_abs, tag = 'smem constant byte address 0x4 - core index']
  #allocation1 [shape = 'u32[144,128]{1,0:T(1,128)}', space=vmem, size = 0x12000, scoped, tag = 'internal scratch']
  %s0 = inlined_call_operand.vmem [shape: bf16[256,128], index: 0, kind: input, shape index: {}]
  %s1 = inlined_call_operand.vmem [shape: bf16[128,512], index: 1, kind: input, shape index: {}]
  %s2 = inlined_call_operand.vmem [shape: f32[1,512], index: 2, kind: input, shape index: {}]
  %s3 = inlined_call_operand.hbm [shape: bf16[512,256], index: 3, kind: input, shape index: {}]
  %s4 = inlined_call_operand.vmem [shape: f32[1,256], index: 4, kind: input, shape index: {}]
  %s5 = inlined_call_operand.vmem [shape: bf16[256,128], index: 5, kind: input, shape index: {}]
  %s6 = inlined_call_operand.vmem [shape: f32[1,128], index: 6, kind: input, shape index: {}]
  %s7 = inlined_call_operand.vmem [shape: bf16[256,128], index: 7, kind: output, shape index: {}]
  %s8 = sld [smem:[#allocation0]]
  $region65: #{_policy_pallas.1} parent=0
    _
  %s10 = ssub.s32 1, %s8
  %s11 = scalar_select 0, %s10, %s8
  $region1: #{_policy_pallas.1} parent=0
    #allocation2 [shape = 'u8[262144]{0}', space=vmem, size = 0x40000, scoped, tag = 'input window, operand 3, single buffered']
    #allocation3 [shape = 's32[2]{0}', space=sflag, size = 0x8, scoped, tag = 'scoped memory for _policy_pallas.1']
    %12 = vsyncpa [#allocation3], 0
    loop: start=0, step=1, limit=4
    $region2: #{_policy_pallas.1} parent=1 // loop_pre_header
      _
    $region3: #{_policy_pallas.1} parent=1 // loop_header
      %s14 = sphi 0, %s18
      %p15 = scmp.ge.s32.totalorder %s14, 4
      %s24 = sphi 0, %s26
      %s27 = sphi 0, %s24
      %s28 = sphi 0, %s27
      %s44 = sphi 0, %s28
      %s48 = sphi 0, %s48
      %s50 = sphi 0, %s48
      %s51 = sphi 0, %s50
      %s65 = sphi 0, %s51
      %s69 = sphi 0, %s69
      %s71 = sphi 0, %s69
      %s72 = sphi 0, %s71
      %s86 = sphi 0, %s72
      %s90 = sphi 0, %s90
      %s92 = sphi 0, %s90
      %s93 = sphi 0, %s92
      %s107 = sphi 0, %s93
      %s111 = sphi 0, %s111
      %s113 = sphi 0, %s111
      %s114 = sphi 0, %s113
      %s128 = sphi 0, %s114
      %s132 = sphi 0, %s132
      %s134 = sphi 0, %s132
      %s135 = sphi 0, %s134
      %s149 = sphi 0, %s135
      %s153 = sphi 0, %s153
      %s155 = sphi 0, %s153
      %s156 = sphi 0, %s155
      %s170 = sphi 0, %s156
      %s176 = sphi 0, %s178
      %s179 = sphi 0, %s176
      %s180 = sphi 0, %s179
      %s196 = sphi 0, %s180
    $region4: #{_policy_pallas.1} parent=1 // loop_header_branch
      %17 = sbr.rel (%p15) target = $region8
    $region5: #{_policy_pallas.1} parent=1 // loop_body
      %s19 = ssub.s32 %s14, 1
      %s20 = ssub.s32 %s14, 2
      %s21 = sadd.s32 %s14, 1
      %s22 = ssub.s32 %s14, %s21
      %p23 = scmp.eq.s32.totalorder %s22, 0
      %s25 = sadd.s32 %s24, 1
      %s26 = scalar_select %p23, %s24, %s25
      %p29 = pneg %p23
      %p30 = scmp.eq.s32.totalorder %s14, 1
      %p31 = por %p29, %p30
      %p32 = scmp.ne.s32.totalorder %s24, %s27
      %p33 = scmp.eq.s32.totalorder %s14, 0
      %p34 = por %p32, %p33
      %p35 = scmp.ne.s32.totalorder %s24, %s27
      %p36 = scmp.eq.s32.totalorder %s19, 1
      %p37 = por %p35, %p36
      %p38 = scmp.ne.s32.totalorder %s27, %s28
      %p39 = scmp.eq.s32.totalorder %s19, 0
      %p40 = por %p38, %p39
      %p41 = scmp.ne.s32.totalorder %s27, %s28
      %p42 = scmp.eq.s32.totalorder %s20, 1
      %p43 = por %p41, %p42
      %p45 = scmp.ne.s32.totalorder %s28, %s44
      %p46 = scmp.eq.s32.totalorder %s20, 0
      %p47 = por %p45, %p46
      %s49 = sadd.s32 %s48, 1
      %p52 = scmp.eq.s32.totalorder %s14, 1
      %p53 = scmp.ne.s32.totalorder %s48, %s50
      %p54 = scmp.eq.s32.totalorder %s14, 0
      %p55 = por %p53, %p54
      %p56 = scmp.ne.s32.totalorder %s48, %s50
      %p57 = scmp.eq.s32.totalorder %s19, 1
      %p58 = por %p56, %p57
      %p59 = scmp.ne.s32.totalorder %s50, %s51
      %p60 = scmp.eq.s32.totalorder %s19, 0
      %p61 = por %p59, %p60
      %p62 = scmp.ne.s32.totalorder %s50, %s51
      %p63 = scmp.eq.s32.totalorder %s20, 1
      %p64 = por %p62, %p63
      %p66 = scmp.ne.s32.totalorder %s51, %s65
      %p67 = scmp.eq.s32.totalorder %s20, 0
      %p68 = por %p66, %p67
      %s70 = sadd.s32 %s69, 1
      %p73 = scmp.eq.s32.totalorder %s14, 1
      %p74 = scmp.ne.s32.totalorder %s69, %s71
      %p75 = scmp.eq.s32.totalorder %s14, 0
      %p76 = por %p74, %p75
      %p77 = scmp.ne.s32.totalorder %s69, %s71
      %p78 = scmp.eq.s32.totalorder %s19, 1
      %p79 = por %p77, %p78
      %p80 = scmp.ne.s32.totalorder %s71, %s72
      %p81 = scmp.eq.s32.totalorder %s19, 0
      %p82 = por %p80, %p81
      %p83 = scmp.ne.s32.totalorder %s71, %s72
      %p84 = scmp.eq.s32.totalorder %s20, 1
      %p85 = por %p83, %p84
      %p87 = scmp.ne.s32.totalorder %s72, %s86
      %p88 = scmp.eq.s32.totalorder %s20, 0
      %p89 = por %p87, %p88
      %s91 = sadd.s32 %s90, 1
      %p94 = scmp.eq.s32.totalorder %s14, 1
      %p95 = scmp.ne.s32.totalorder %s90, %s92
      %p96 = scmp.eq.s32.totalorder %s14, 0
      %p97 = por %p95, %p96
      %p98 = scmp.ne.s32.totalorder %s90, %s92
      %p99 = scmp.eq.s32.totalorder %s19, 1
      %p100 = por %p98, %p99
      %p101 = scmp.ne.s32.totalorder %s92, %s93
      %p102 = scmp.eq.s32.totalorder %s19, 0
      %p103 = por %p101, %p102
      %p104 = scmp.ne.s32.totalorder %s92, %s93
      %p105 = scmp.eq.s32.totalorder %s20, 1
      %p106 = por %p104, %p105
      %p108 = scmp.ne.s32.totalorder %s93, %s107
      %p109 = scmp.eq.s32.totalorder %s20, 0
      %p110 = por %p108, %p109
      %s112 = sadd.s32 %s111, 1
      %p115 = scmp.eq.s32.totalorder %s14, 1
      %p116 = scmp.ne.s32.totalorder %s111, %s113
      %p117 = scmp.eq.s32.totalorder %s14, 0
      %p118 = por %p116, %p117
      %p119 = scmp.ne.s32.totalorder %s111, %s113
      %p120 = scmp.eq.s32.totalorder %s19, 1
      %p121 = por %p119, %p120
      %p122 = scmp.ne.s32.totalorder %s113, %s114
      %p123 = scmp.eq.s32.totalorder %s19, 0
      %p124 = por %p122, %p123
      %p125 = scmp.ne.s32.totalorder %s113, %s114
      %p126 = scmp.eq.s32.totalorder %s20, 1
      %p127 = por %p125, %p126
      %p129 = scmp.ne.s32.totalorder %s114, %s128
      %p130 = scmp.eq.s32.totalorder %s20, 0
      %p131 = por %p129, %p130
      %s133 = sadd.s32 %s132, 1
      %p136 = scmp.eq.s32.totalorder %s14, 1
      %p137 = scmp.ne.s32.totalorder %s132, %s134
      %p138 = scmp.eq.s32.totalorder %s14, 0
      %p139 = por %p137, %p138
      %p140 = scmp.ne.s32.totalorder %s132, %s134
      %p141 = scmp.eq.s32.totalorder %s19, 1
      %p142 = por %p140, %p141
      %p143 = scmp.ne.s32.totalorder %s134, %s135
      %p144 = scmp.eq.s32.totalorder %s19, 0
      %p145 = por %p143, %p144
      %p146 = scmp.ne.s32.totalorder %s134, %s135
      %p147 = scmp.eq.s32.totalorder %s20, 1
      %p148 = por %p146, %p147
      %p150 = scmp.ne.s32.totalorder %s135, %s149
      %p151 = scmp.eq.s32.totalorder %s20, 0
      %p152 = por %p150, %p151
      %s154 = sadd.s32 %s153, 1
      %p157 = scmp.eq.s32.totalorder %s14, 1
      %p158 = scmp.ne.s32.totalorder %s153, %s155
      %p159 = scmp.eq.s32.totalorder %s14, 0
      %p160 = por %p158, %p159
      %p161 = scmp.ne.s32.totalorder %s153, %s155
      %p162 = scmp.eq.s32.totalorder %s19, 1
      %p163 = por %p161, %p162
      %p164 = scmp.ne.s32.totalorder %s155, %s156
      %p165 = scmp.eq.s32.totalorder %s19, 0
      %p166 = por %p164, %p165
      %p167 = scmp.ne.s32.totalorder %s155, %s156
      %p168 = scmp.eq.s32.totalorder %s20, 1
      %p169 = por %p167, %p168
      %p171 = scmp.ne.s32.totalorder %s156, %s170
      %p172 = scmp.eq.s32.totalorder %s20, 0
      %p173 = por %p171, %p172
      %s174 = ssub.s32 %s14, %s21
      %p175 = scmp.eq.s32.totalorder %s174, 0
      %s177 = sadd.s32 %s176, 1
      %s178 = scalar_select %p175, %s176, %s177
      %p181 = pneg %p175
      %p182 = scmp.eq.s32.totalorder %s14, 1
      %p183 = por %p181, %p182
      %p184 = scmp.ne.s32.totalorder %s176, %s179
      %p185 = scmp.eq.s32.totalorder %s14, 0
      %p186 = por %p184, %p185
      %p187 = scmp.ne.s32.totalorder %s176, %s179
      %p188 = scmp.eq.s32.totalorder %s19, 1
      %p189 = por %p187, %p188
      %p190 = scmp.ne.s32.totalorder %s179, %s180
      %p191 = scmp.eq.s32.totalorder %s19, 0
      %p192 = por %p190, %p191
      %p193 = scmp.ne.s32.totalorder %s179, %s180
      %p194 = scmp.eq.s32.totalorder %s20, 1
      %p195 = por %p193, %p194
      %p197 = scmp.ne.s32.totalorder %s180, %s196
      %p198 = scmp.eq.s32.totalorder %s20, 0
      %p199 = por %p197, %p198
      %p200 = scmp.le.s32.totalorder 1, %s14
      %p201 = scmp.lt.s32.totalorder %s14, 3
      %p202 = pnand %p200, %p201
      %p203 = pneg %p202
      // Predicated region
      $region9: #{_policy_pallas.1} parent=5 // pred_check
        _
      $region10: #{_policy_pallas.1} parent=5 // pred_check_branch
        %205 = sbr.rel (%p202) target = $region12
      $region11: #{_policy_pallas.1} parent=5 // pred_region
        %s206 = ssub.s32 %s14, 1
        // Predicated region
        $region13: #{_policy_pallas.1} parent=11 // pred_check
          %p207 = pneg %p61
        $region14: #{_policy_pallas.1} parent=11 // pred_check_branch
          %209 = sbr.rel (%p207) target = $region16
        $region15: #{_policy_pallas.1} parent=11 // pred_region
          _
        $region16: #{_policy_pallas.1} parent=11 // pred_fallthru
          _
        // Predicated region
        $region17: #{_policy_pallas.1} parent=11 // pred_check
          %p210 = pneg %p82
        $region18: #{_policy_pallas.1} parent=11 // pred_check_branch
          %212 = sbr.rel (%p210) target = $region20
        $region19: #{_policy_pallas.1} parent=11 // pred_region
          _
        $region20: #{_policy_pallas.1} parent=11 // pred_fallthru
          _
        // Predicated region
        $region21: #{_policy_pallas.1} parent=11 // pred_check
          %p213 = pneg %p103
        $region22: #{_policy_pallas.1} parent=11 // pred_check_branch
          %215 = sbr.rel (%p213) target = $region24
        $region23: #{_policy_pallas.1} parent=11 // pred_region
          %s217 = ssub.s32 8192, 8192
          %218 = vsyncadd [#allocation3], %s217
          %s219 = sshll.u32 [#allocation2], 4
          %s220 = int_to_ptr.vmem [resolvable:$true] %s219
          %225 = dma.hbm_to_vmem [thread:$0]  %s3, 8192, %s220, [#allocation3], 128, 128, 8
        $region24: #{_policy_pallas.1} parent=11 // pred_fallthru
          _
        // Predicated region
        $region25: #{_policy_pallas.1} parent=11 // pred_check
          %p226 = pneg %p124
        $region26: #{_policy_pallas.1} parent=11 // pred_check_branch
          %228 = sbr.rel (%p226) target = $region28
        $region27: #{_policy_pallas.1} parent=11 // pred_region
          _
        $region28: #{_policy_pallas.1} parent=11 // pred_fallthru
          _
        // Predicated region
        $region29: #{_policy_pallas.1} parent=11 // pred_check
          %p229 = pneg %p145
        $region30: #{_policy_pallas.1} parent=11 // pred_check_branch
          %231 = sbr.rel (%p229) target = $region32
        $region31: #{_policy_pallas.1} parent=11 // pred_region
          _
        $region32: #{_policy_pallas.1} parent=11 // pred_fallthru
          _
        // Predicated region
        $region33: #{_policy_pallas.1} parent=11 // pred_check
          %p232 = pneg %p166
        $region34: #{_policy_pallas.1} parent=11 // pred_check_branch
          %234 = sbr.rel (%p232) target = $region36
        $region35: #{_policy_pallas.1} parent=11 // pred_region
          _
        $region36: #{_policy_pallas.1} parent=11 // pred_fallthru
          _
      $region12: #{_policy_pallas.1} parent=5 // pred_fallthru
        _
      %p235 = scmp.lt.s32.totalorder %s14, 2
      // Predicated region
      $region37: #{_policy_pallas.1} parent=5 // pred_check
        %p236 = pneg %p235
      $region38: #{_policy_pallas.1} parent=5 // pred_check_branch
        %238 = sbr.rel (%p236) target = $region40
      $region39: #{_policy_pallas.1} parent=5 // pred_region
        // Predicated region
        $region41: #{_policy_pallas.1} parent=39 // pred_check
          %p239 = pneg %p34
        $region42: #{_policy_pallas.1} parent=39 // pred_check_branch
          %241 = sbr.rel (%p239) target = $region44
        $region43: #{_policy_pallas.1} parent=39 // pred_region
          %s242 = smul.u32 16, %s14
          %p243 = scmp.lt.s32.totalorder %s242, 31
          %s244 = scalar_select %p243, %s242, 31
          %s245 = smul.addr %s244, 4
          %s246 = scalar_lea.vmem %s0, %s245
          %s247 = smul.u32 16, %s14
        $region44: #{_policy_pallas.1} parent=39 // pred_fallthru
          _
      $region40: #{_policy_pallas.1} parent=5 // pred_fallthru
        _
      %p248 = scmp.le.s32.totalorder 1, %s14
      %p249 = scmp.lt.s32.totalorder %s14, 3
      %p250 = pnand %p248, %p249
      %p251 = pneg %p250
      // Predicated region
      $region45: #{_policy_pallas.1} parent=5 // pred_check
        _
      $region46: #{_policy_pallas.1} parent=5 // pred_check_branch
        %253 = sbr.rel (%p250) target = $region48
      $region47: #{_policy_pallas.1} parent=5 // pred_region
        %s254 = ssub.s32 %s14, 1
        // Predicated region
        $region49: #{_policy_pallas.1} parent=47 // pred_check
          %p255 = pneg %p103
        $region50: #{_policy_pallas.1} parent=47 // pred_check_branch
          %257 = sbr.rel (%p255) target = $region52
        $region51: #{_policy_pallas.1} parent=47 // pred_region
          %258 = dma.done [#allocation3], 8192
        $region52: #{_policy_pallas.1} parent=47 // pred_fallthru
          _
        %s259 = smul.u32 16, %s19
        %p260 = scmp.lt.s32.totalorder %s259, 31
        %s261 = scalar_select %p260, %s259, 31
        %s262 = smul.addr %s261, 4
        %s263 = scalar_lea.vmem %s0, %s262
        %p264 = pneg %p40
        %p265 = pneg %p37
        %p266 = pneg %p61
        %p267 = pneg %p58
        %p268 = pneg %p82
        %p269 = pneg %p79
        %p270 = pneg %p103
        %p271 = pneg %p100
        %p272 = pneg %p124
        %p273 = pneg %p121
        %p274 = pneg %p145
        %p275 = pneg %p142
        %p276 = pneg %p166
        %p277 = pneg %p163
        %p278 = pneg %p192
        %p279 = pneg %p189
        %s280 = smul.u32 16, %s19
        %p281 = scmp.lt.s32.totalorder %s280, 31
        %s282 = scalar_select %p281, %s280, 31
        %s283 = smul.addr %s282, 4
        %s284 = scalar_lea.vmem %s7, %s283
        %s285 = smul.u32 16, %s19
        %p286 = scmp.lt.s32.totalorder %s285, 31
        %s287 = scalar_select %p286, %s285, 31
        %s288 = smul.addr %s287, 4
        %s289 = scalar_lea.vmem %s0, %s288
        %s290 = smul.u32 16, %s19
        %s291 = smul.u32 16, %s19
        %p292 = scmp.lt.s32.totalorder %s291, 31
        %s293 = scalar_select %p292, %s291, 31
        %s294 = smul.addr %s293, 4
        %s295 = scalar_lea.vmem %s7, %s294
        %s296 = smul.u32 16, %s19
        %v298 = vld [vmem:[%s289] sm:$0xf]
        %v299 = vld [vmem:[%s289 + $0x4] sm:$0xf]
        %v300 = vld [vmem:[%s289 + $0x8] sm:$0xf]
        %v301 = vld [vmem:[%s289 + $0xc] sm:$0xf]
        %v302 = vld [vmem:[%s289 + $0x10] sm:$0xf]
        %v303 = vld [vmem:[%s289 + $0x14] sm:$0xf]
        %v304 = vld [vmem:[%s289 + $0x18] sm:$0xf]
        %v305 = vld [vmem:[%s289 + $0x1c] sm:$0xf]
        %v306 = vld [vmem:[%s289 + $0x20] sm:$0xf]
        %v307 = vld [vmem:[%s289 + $0x24] sm:$0xf]
        %v308 = vld [vmem:[%s289 + $0x28] sm:$0xf]
        %v309 = vld [vmem:[%s289 + $0x2c] sm:$0xf]
        %v310 = vld [vmem:[%s289 + $0x30] sm:$0xf]
        %v311 = vld [vmem:[%s289 + $0x34] sm:$0xf]
        %v312 = vld [vmem:[%s289 + $0x38] sm:$0xf]
        %v313 = vld [vmem:[%s289 + $0x3c] sm:$0xf]
        %v314 = vld [vmem:[%s1] sm:$0xff]
        %v315 = vld [vmem:[%s1 + $0x8] sm:$0xff]
        %v316 = vld [vmem:[%s1 + $0x10] sm:$0xff]
        %v317 = vld [vmem:[%s1 + $0x18] sm:$0xff]
        %v318 = vld [vmem:[%s1 + $0x20] sm:$0xff]
        %v319 = vld [vmem:[%s1 + $0x28] sm:$0xff]
        %v320 = vld [vmem:[%s1 + $0x30] sm:$0xff]
        %v321 = vld [vmem:[%s1 + $0x38] sm:$0xff]
        %v322 = vld [vmem:[%s1 + $0x40] sm:$0xff]
        %v323 = vld [vmem:[%s1 + $0x48] sm:$0xff]
        %v324 = vld [vmem:[%s1 + $0x50] sm:$0xff]
        %v325 = vld [vmem:[%s1 + $0x58] sm:$0xff]
        %v326 = vld [vmem:[%s1 + $0x60] sm:$0xff]
        %v327 = vld [vmem:[%s1 + $0x68] sm:$0xff]
        %v328 = vld [vmem:[%s1 + $0x70] sm:$0xff]
        %v329 = vld [vmem:[%s1 + $0x78] sm:$0xff]
        %v330 = vld [vmem:[%s1 + $0x80] sm:$0xff]
        %v331 = vld [vmem:[%s1 + $0x88] sm:$0xff]
        %v332 = vld [vmem:[%s1 + $0x90] sm:$0xff]
        %v333 = vld [vmem:[%s1 + $0x98] sm:$0xff]
        %v334 = vld [vmem:[%s1 + $0xa0] sm:$0xff]
        %v335 = vld [vmem:[%s1 + $0xa8] sm:$0xff]
        %v336 = vld [vmem:[%s1 + $0xb0] sm:$0xff]
        %v337 = vld [vmem:[%s1 + $0xb8] sm:$0xff]
        %v338 = vld [vmem:[%s1 + $0xc0] sm:$0xff]
        %v339 = vld [vmem:[%s1 + $0xc8] sm:$0xff]
        %v340 = vld [vmem:[%s1 + $0xd0] sm:$0xff]
        %v341 = vld [vmem:[%s1 + $0xd8] sm:$0xff]
        %v342 = vld [vmem:[%s1 + $0xe0] sm:$0xff]
        %v343 = vld [vmem:[%s1 + $0xe8] sm:$0xff]
        %v344 = vld [vmem:[%s1 + $0xf0] sm:$0xff]
        %v345 = vld [vmem:[%s1 + $0xf8] sm:$0xff]
        %v362 = vunpack.c.l.b16 %v298
        %v363 = vunpack.c.l.b16 %v299
        %v364 = vunpack.c.l.b16 %v300
        %v365 = vunpack.c.l.b16 %v301
        %v366 = vunpack.c.l.b16 %v302
        %v367 = vunpack.c.l.b16 %v303
        %v368 = vunpack.c.l.b16 %v304
        %v369 = vunpack.c.l.b16 %v305
        %v370 = vunpack.c.l.b16 %v306
        %v371 = vunpack.c.l.b16 %v307
        %v372 = vunpack.c.l.b16 %v308
        %v373 = vunpack.c.l.b16 %v309
        %v374 = vunpack.c.l.b16 %v310
        %v375 = vunpack.c.l.b16 %v311
        %v376 = vunpack.c.l.b16 %v312
        %v377 = vunpack.c.l.b16 %v313
        %v378 = vpack.c.b16 %v363, %v362
        %v379 = vpack.c.b16 %v365, %v364
        %v380 = vpack.c.b16 %v367, %v366
        %v381 = vpack.c.b16 %v369, %v368
        %v382 = vpack.c.b16 %v371, %v370
        %v383 = vpack.c.b16 %v373, %v372
        %v384 = vpack.c.b16 %v375, %v374
        %v385 = vpack.c.b16 %v377, %v376
        %v426 = vunpack.c.l.b16 %v314
        %v427 = vunpack.c.h.b16 %v314
        %v428 = vunpack.c.l.b16 %v315
        %v429 = vunpack.c.h.b16 %v315
        %v430 = vunpack.c.l.b16 %v316
        %v431 = vunpack.c.h.b16 %v316
        %v432 = vunpack.c.l.b16 %v317
        %v433 = vunpack.c.h.b16 %v317
        %v434 = vunpack.c.l.b16 %v318
        %v435 = vunpack.c.h.b16 %v318
        %v436 = vunpack.c.l.b16 %v319
        %v437 = vunpack.c.h.b16 %v319
        %v438 = vunpack.c.l.b16 %v320
        %v439 = vunpack.c.h.b16 %v320
        %v440 = vunpack.c.l.b16 %v321
        %v441 = vunpack.c.h.b16 %v321
        %v442 = vunpack.c.l.b16 %v322
        %v443 = vunpack.c.h.b16 %v322
        %v444 = vunpack.c.l.b16 %v323
        %v445 = vunpack.c.h.b16 %v323
        %v446 = vunpack.c.l.b16 %v324
        %v447 = vunpack.c.h.b16 %v324
        %v448 = vunpack.c.l.b16 %v325
        %v449 = vunpack.c.h.b16 %v325
        %v450 = vunpack.c.l.b16 %v326
        %v451 = vunpack.c.h.b16 %v326
        %v452 = vunpack.c.l.b16 %v327
        %v453 = vunpack.c.h.b16 %v327
        %v454 = vunpack.c.l.b16 %v328
        %v455 = vunpack.c.h.b16 %v328
        %v456 = vunpack.c.l.b16 %v329
        %v457 = vunpack.c.h.b16 %v329
        %v458 = vunpack.c.l.b16 %v330
        %v459 = vunpack.c.h.b16 %v330
        %v460 = vunpack.c.l.b16 %v331
        %v461 = vunpack.c.h.b16 %v331
        %v462 = vunpack.c.l.b16 %v332
        %v463 = vunpack.c.h.b16 %v332
        %v464 = vunpack.c.l.b16 %v333
        %v465 = vunpack.c.h.b16 %v333
        %v466 = vunpack.c.l.b16 %v334
        %v467 = vunpack.c.h.b16 %v334
        %v468 = vunpack.c.l.b16 %v335
        %v469 = vunpack.c.h.b16 %v335
        %v470 = vunpack.c.l.b16 %v336
        %v471 = vunpack.c.h.b16 %v336
        %v472 = vunpack.c.l.b16 %v337
        %v473 = vunpack.c.h.b16 %v337
        %v474 = vunpack.c.l.b16 %v338
        %v475 = vunpack.c.h.b16 %v338
        %v476 = vunpack.c.l.b16 %v339
        %v477 = vunpack.c.h.b16 %v339
        %v478 = vunpack.c.l.b16 %v340
        %v479 = vunpack.c.h.b16 %v340
        %v480 = vunpack.c.l.b16 %v341
        %v481 = vunpack.c.h.b16 %v341
        %v482 = vunpack.c.l.b16 %v342
        %v483 = vunpack.c.h.b16 %v342
        %v484 = vunpack.c.l.b16 %v343
        %v485 = vunpack.c.h.b16 %v343
        %v486 = vunpack.c.l.b16 %v344
        %v487 = vunpack.c.h.b16 %v344
        %v488 = vunpack.c.l.b16 %v345
        %v489 = vunpack.c.h.b16 %v345
        %v490 = vpack.c.b16 %v430, %v426
        %v491 = vpack.c.b16 %v431, %v427
        %v492 = vpack.c.b16 %v432, %v428
        %v493 = vpack.c.b16 %v433, %v429
        %v494 = vpack.c.b16 %v438, %v434
        %v495 = vpack.c.b16 %v439, %v435
        %v496 = vpack.c.b16 %v440, %v436
        %v497 = vpack.c.b16 %v441, %v437
        %v498 = vpack.c.b16 %v446, %v442
        %v499 = vpack.c.b16 %v447, %v443
        %v500 = vpack.c.b16 %v448, %v444
        %v501 = vpack.c.b16 %v449, %v445
        %v502 = vpack.c.b16 %v454, %v450
        %v503 = vpack.c.b16 %v455, %v451
        %v504 = vpack.c.b16 %v456, %v452
        %v505 = vpack.c.b16 %v457, %v453
        %v506 = vpack.c.b16 %v462, %v458
        %v507 = vpack.c.b16 %v463, %v459
        %v508 = vpack.c.b16 %v464, %v460
        %v509 = vpack.c.b16 %v465, %v461
        %v510 = vpack.c.b16 %v470, %v466
        %v511 = vpack.c.b16 %v471, %v467
        %v512 = vpack.c.b16 %v472, %v468
        %v513 = vpack.c.b16 %v473, %v469
        %v514 = vpack.c.b16 %v478, %v474
        %v515 = vpack.c.b16 %v479, %v475
        %v516 = vpack.c.b16 %v480, %v476
        %v517 = vpack.c.b16 %v481, %v477
        %v518 = vpack.c.b16 %v486, %v482
        %v519 = vpack.c.b16 %v487, %v483
        %v520 = vpack.c.b16 %v488, %v484
        %v521 = vpack.c.b16 %v489, %v485
        %554 = vmatprep.subr.bf16.mxu0 %v491
        %555 = vmatpush1.bf16.msra.mxu0 %v490
        %556 = vmatprep.subr.bf16.mxu0 %v495
        %557 = vmatpush1.bf16.msra.mxu0 %v494
        %558 = vmatprep.subr.bf16.mxu0 %v499
        %559 = vmatpush1.bf16.msra.mxu0 %v498
        %560 = vmatprep.subr.bf16.mxu0 %v503
        %561 = vmatpush1.bf16.msra.mxu0 %v502
        %562 = vmatprep.subr.bf16.mxu0 %v507
        %563 = vmatpush1.bf16.msra.mxu0 %v506
        %564 = vmatprep.subr.bf16.mxu0 %v511
        %565 = vmatpush1.bf16.msra.mxu0 %v510
        %566 = vmatprep.subr.bf16.mxu0 %v515
        %567 = vmatpush1.bf16.msra.mxu0 %v514
        %568 = vmatprep.subr.bf16.mxu0 %v519
        %569 = vmatpush1.bf16.msra.mxu0 %v518
        %570 = vmatprep.subr.bf16.mxu0 0
        %571 = vmatpush1.bf16.msra.mxu0 0
        %572 = vmatprep.subr.bf16.mxu0 0
        %573 = vmatpush1.bf16.msra.mxu0 0
        %574 = vmatprep.subr.bf16.mxu0 0
        %575 = vmatpush1.bf16.msra.mxu0 0
        %576 = vmatprep.subr.bf16.mxu0 0
        %577 = vmatpush1.bf16.msra.mxu0 0
        %578 = vmatprep.subr.bf16.mxu0 0
        %579 = vmatpush1.bf16.msra.mxu0 0
        %580 = vmatprep.subr.bf16.mxu0 0
        %581 = vmatpush1.bf16.msra.mxu0 0
        %582 = vmatprep.subr.bf16.mxu0 0
        %583 = vmatpush1.bf16.msra.mxu0 0
        %584 = vmatprep.subr.bf16.mxu0 0
        %585 = vmatpush1.bf16.msra.mxu0 0
        %586 = vmatprep.mubr.bf16.mxu0 0
        %587 = vmatmul.mubr.bf16.gmra.mrb[0].mxu0 %v378
        %v588 = vpop.f32.mrb[0].mxu0
        %v589 = vadd.f32 0.0, %v588
        %v590 = vpop.f32.mrb[0].mxu0
        %v591 = vadd.f32 0.0, %v590
        %v592 = vpop.f32.mrb[0].mxu0
        %v593 = vadd.f32 0.0, %v592
        %v594 = vpop.f32.mrb[0].mxu0
        %v595 = vadd.f32 0.0, %v594
        %596 = vmatprep.mubr.bf16.mxu0 0
        %597 = vmatmul.mubr.bf16.gmra.mrb[0].mxu0 %v379
        %v598 = vpop.f32.mrb[0].mxu0
        %v599 = vadd.f32 0.0, %v598
        %v600 = vpop.f32.mrb[0].mxu0
        %v601 = vadd.f32 0.0, %v600
        %v602 = vpop.f32.mrb[0].mxu0
        %v603 = vadd.f32 0.0, %v602
        %v604 = vpop.f32.mrb[0].mxu0
        %v605 = vadd.f32 0.0, %v604
        %606 = vmatprep.mubr.bf16.mxu0 0
        %607 = vmatmul.mubr.bf16.gmra.mrb[0].mxu0 %v380
        %v608 = vpop.f32.mrb[0].mxu0
        %v609 = vadd.f32 0.0, %v608
        %v610 = vpop.f32.mrb[0].mxu0
        %v611 = vadd.f32 0.0, %v610
        %v612 = vpop.f32.mrb[0].mxu0
        %v613 = vadd.f32 0.0, %v612
        %v614 = vpop.f32.mrb[0].mxu0
        %v615 = vadd.f32 0.0, %v614
        %616 = vmatprep.mubr.bf16.mxu0 0
        %617 = vmatmul.mubr.bf16.gmra.mrb[0].mxu0 %v381
        %v618 = vpop.f32.mrb[0].mxu0
        %v619 = vadd.f32 0.0, %v618
        %v620 = vpop.f32.mrb[0].mxu0
        %v621 = vadd.f32 0.0, %v620
        %v622 = vpop.f32.mrb[0].mxu0
        %v623 = vadd.f32 0.0, %v622
        %v624 = vpop.f32.mrb[0].mxu0
        %v625 = vadd.f32 0.0, %v624
        %626 = vmatprep.mubr.bf16.mxu0 0
        %627 = vmatmul.mubr.bf16.gmra.mrb[0].mxu0 %v382
        %v628 = vpop.f32.mrb[0].mxu0
        %v629 = vadd.f32 0.0, %v628
        %v630 = vpop.f32.mrb[0].mxu0
        %v631 = vadd.f32 0.0, %v630
        %v632 = vpop.f32.mrb[0].mxu0
        %v633 = vadd.f32 0.0, %v632
        %v634 = vpop.f32.mrb[0].mxu0
        %v635 = vadd.f32 0.0, %v634
        %636 = vmatprep.mubr.bf16.mxu0 0
        %637 = vmatmul.mubr.bf16.gmra.mrb[0].mxu0 %v383
        %v638 = vpop.f32.mrb[0].mxu0
        %v639 = vadd.f32 0.0, %v638
        %v640 = vpop.f32.mrb[0].mxu0
        %v641 = vadd.f32 0.0, %v640
        %v642 = vpop.f32.mrb[0].mxu0
        %v643 = vadd.f32 0.0, %v642
        %v644 = vpop.f32.mrb[0].mxu0
        %v645 = vadd.f32 0.0, %v644
        %646 = vmatprep.mubr.bf16.mxu0 0
        %647 = vmatmul.mubr.bf16.gmra.mrb[0].mxu0 %v384
        %v648 = vpop.f32.mrb[0].mxu0
        %v649 = vadd.f32 0.0, %v648
        %v650 = vpop.f32.mrb[0].mxu0
        %v651 = vadd.f32 0.0, %v650
        %v652 = vpop.f32.mrb[0].mxu0
        %v653 = vadd.f32 0.0, %v652
        %v654 = vpop.f32.mrb[0].mxu0
        %v655 = vadd.f32 0.0, %v654
        %656 = vmatprep.mubr.bf16.mxu0 0
        %657 = vmatmul.mubr.bf16.gmra.mrb[0].mxu0 %v385
        %v658 = vpop.f32.mrb[0].mxu0
        %v659 = vadd.f32 0.0, %v658
        %v660 = vpop.f32.mrb[0].mxu0
        %v661 = vadd.f32 0.0, %v660
        %v662 = vpop.f32.mrb[0].mxu0
        %v663 = vadd.f32 0.0, %v662
        %v664 = vpop.f32.mrb[0].mxu0
        %v665 = vadd.f32 0.0, %v664
        %666 = vdwg.mxu0
        %667 = vmatprep.subr.bf16.mxu0 %v493
        %668 = vmatpush1.bf16.msra.mxu0 %v492
        %669 = vmatprep.subr.bf16.mxu0 %v497
        %670 = vmatpush1.bf16.msra.mxu0 %v496
        %671 = vmatprep.subr.bf16.mxu0 %v501
        %672 = vmatpush1.bf16.msra.mxu0 %v500
        %673 = vmatprep.subr.bf16.mxu0 %v505
        %674 = vmatpush1.bf16.msra.mxu0 %v504
        %675 = vmatprep.subr.bf16.mxu0 %v509
        %676 = vmatpush1.bf16.msra.mxu0 %v508
        %677 = vmatprep.subr.bf16.mxu0 %v513
        %678 = vmatpush1.bf16.msra.mxu0 %v512
        %679 = vmatprep.subr.bf16.mxu0 %v517
        %680 = vmatpush1.bf16.msra.mxu0 %v516
        %681 = vmatprep.subr.bf16.mxu0 %v521
        %682 = vmatpush1.bf16.msra.mxu0 %v520
        %683 = vmatprep.subr.bf16.mxu0 0
        %684 = vmatpush1.bf16.msra.mxu0 0
        %685 = vmatprep.subr.bf16.mxu0 0
        %686 = vmatpush1.bf16.msra.mxu0 0
        %687 = vmatprep.subr.bf16.mxu0 0
        %688 = vmatpush1.bf16.msra.mxu0 0
        %689 = vmatprep.subr.bf16.mxu0 0
        %690 = vmatpush1.bf16.msra.mxu0 0
        %691 = vmatprep.subr.bf16.mxu0 0
        %692 = vmatpush1.bf16.msra.mxu0 0
        %693 = vmatprep.subr.bf16.mxu0 0
        %694 = vmatpush1.bf16.msra.mxu0 0
        %695 = vmatprep.subr.bf16.mxu0 0
        %696 = vmatpush1.bf16.msra.mxu0 0
        %697 = vmatprep.subr.bf16.mxu0 0
        %698 = vmatpush1.bf16.msra.mxu0 0
        %699 = vmatprep.mubr.bf16.mxu0 0
        %700 = vmatmul.mubr.bf16.gmra.mrb[0].mxu0 %v378
        %v701 = vpop.f32.mrb[0].mxu0
        %v702 = vadd.f32 0.0, %v701
        %v703 = vpop.f32.mrb[0].mxu0
        %v704 = vadd.f32 0.0, %v703
        %v705 = vpop.f32.mrb[0].mxu0
        %v706 = vadd.f32 0.0, %v705
        %v707 = vpop.f32.mrb[0].mxu0
        %v708 = vadd.f32 0.0, %v707
        %709 = vmatprep.mubr.bf16.mxu0 0
        %710 = vmatmul.mubr.bf16.gmra.mrb[0].mxu0 %v379
        %v711 = vpop.f32.mrb[0].mxu0
        %v712 = vadd.f32 0.0, %v711
        %v713 = vpop.f32.mrb[0].mxu0
        %v714 = vadd.f32 0.0, %v713
        %v715 = vpop.f32.mrb[0].mxu0
        %v716 = vadd.f32 0.0, %v715
        %v717 = vpop.f32.mrb[0].mxu0
        %v718 = vadd.f32 0.0, %v717
        %719 = vmatprep.mubr.bf16.mxu0 0
        %720 = vmatmul.mubr.bf16.gmra.mrb[0].mxu0 %v380
        %v721 = vpop.f32.mrb[0].mxu0
        %v722 = vadd.f32 0.0, %v721
        %v723 = vpop.f32.mrb[0].mxu0
        %v724 = vadd.f32 0.0, %v723
        %v725 = vpop.f32.mrb[0].mxu0
        %v726 = vadd.f32 0.0, %v725
        %v727 = vpop.f32.mrb[0].mxu0
        %v728 = vadd.f32 0.0, %v727
        %729 = vmatprep.mubr.bf16.mxu0 0
        %730 = vmatmul.mubr.bf16.gmra.mrb[0].mxu0 %v381
        %v731 = vpop.f32.mrb[0].mxu0
        %v732 = vadd.f32 0.0, %v731
        %v733 = vpop.f32.mrb[0].mxu0
        %v734 = vadd.f32 0.0, %v733
        %v735 = vpop.f32.mrb[0].mxu0
        %v736 = vadd.f32 0.0, %v735
        %v737 = vpop.f32.mrb[0].mxu0
        %v738 = vadd.f32 0.0, %v737
        %739 = vmatprep.mubr.bf16.mxu0 0
        %740 = vmatmul.mubr.bf16.gmra.mrb[0].mxu0 %v382
        %v741 = vpop.f32.mrb[0].mxu0
        %v742 = vadd.f32 0.0, %v741
        %v743 = vpop.f32.mrb[0].mxu0
        %v744 = vadd.f32 0.0, %v743
        %v745 = vpop.f32.mrb[0].mxu0
        %v746 = vadd.f32 0.0, %v745
        %v747 = vpop.f32.mrb[0].mxu0
        %v748 = vadd.f32 0.0, %v747
        %749 = vmatprep.mubr.bf16.mxu0 0
        %750 = vmatmul.mubr.bf16.gmra.mrb[0].mxu0 %v383
        %v751 = vpop.f32.mrb[0].mxu0
        %v752 = vadd.f32 0.0, %v751
        %v753 = vpop.f32.mrb[0].mxu0
        %v754 = vadd.f32 0.0, %v753
        %v755 = vpop.f32.mrb[0].mxu0
        %v756 = vadd.f32 0.0, %v755
        %v757 = vpop.f32.mrb[0].mxu0
        %v758 = vadd.f32 0.0, %v757
        %759 = vmatprep.mubr.bf16.mxu0 0
        %760 = vmatmul.mubr.bf16.gmra.mrb[0].mxu0 %v384
        %v761 = vpop.f32.mrb[0].mxu0
        %v762 = vadd.f32 0.0, %v761
        %v763 = vpop.f32.mrb[0].mxu0
        %v764 = vadd.f32 0.0, %v763
        %v765 = vpop.f32.mrb[0].mxu0
        %v766 = vadd.f32 0.0, %v765
        %v767 = vpop.f32.mrb[0].mxu0
        %v768 = vadd.f32 0.0, %v767
        %769 = vmatprep.mubr.bf16.mxu0 0
        %770 = vmatmul.mubr.bf16.gmra.mrb[0].mxu0 %v385
        %v771 = vpop.f32.mrb[0].mxu0
        %v772 = vadd.f32 0.0, %v771
        %v773 = vpop.f32.mrb[0].mxu0
        %v774 = vadd.f32 0.0, %v773
        %v775 = vpop.f32.mrb[0].mxu0
        %v776 = vadd.f32 0.0, %v775
        %v777 = vpop.f32.mrb[0].mxu0
        %v778 = vadd.f32 0.0, %v777
        %779 = vdwg.mxu0
        %v780 = vpack.c.bf16 %v593, %v589
        %v781 = vpack.c.bf16 %v595, %v591
        %v782 = vpack.c.bf16 %v706, %v702
        %v783 = vpack.c.bf16 %v708, %v704
        %v784 = vpack.c.bf16 %v603, %v599
        %v785 = vpack.c.bf16 %v605, %v601
        %v786 = vpack.c.bf16 %v716, %v712
        %v787 = vpack.c.bf16 %v718, %v714
        %v788 = vpack.c.bf16 %v613, %v609
        %v789 = vpack.c.bf16 %v615, %v611
        %v790 = vpack.c.bf16 %v726, %v722
        %v791 = vpack.c.bf16 %v728, %v724
        %v792 = vpack.c.bf16 %v623, %v619
        %v793 = vpack.c.bf16 %v625, %v621
        %v794 = vpack.c.bf16 %v736, %v732
        %v795 = vpack.c.bf16 %v738, %v734
        %v796 = vpack.c.bf16 %v633, %v629
        %v797 = vpack.c.bf16 %v635, %v631
        %v798 = vpack.c.bf16 %v746, %v742
        %v799 = vpack.c.bf16 %v748, %v744
        %v800 = vpack.c.bf16 %v643, %v639
        %v801 = vpack.c.bf16 %v645, %v641
        %v802 = vpack.c.bf16 %v756, %v752
        %v803 = vpack.c.bf16 %v758, %v754
        %v804 = vpack.c.bf16 %v653, %v649
        %v805 = vpack.c.bf16 %v655, %v651
        %v806 = vpack.c.bf16 %v766, %v762
        %v807 = vpack.c.bf16 %v768, %v764
        %v808 = vpack.c.bf16 %v663, %v659
        %v809 = vpack.c.bf16 %v665, %v661
        %v810 = vpack.c.bf16 %v776, %v772
        %v811 = vpack.c.bf16 %v778, %v774
        %v812 = vld [vmem:[%s2] sm:$0xf]
        %v814 = vlaneseq
        %v815 = vshrl.u32 %v814, 7
        %v816 = vsub.s32 0, %v815
        %v817 = vrot.slane %v812, %v816
        %v818 = vlaneseq
        %v819 = vshrl.u32 %v818, 7
        %v820 = vsub.s32 1, %v819
        %v821 = vrot.slane %v812, %v820
        %v822 = vlaneseq
        %v823 = vshrl.u32 %v822, 7
        %v824 = vsub.s32 2, %v823
        %v825 = vrot.slane %v812, %v824
        %v826 = vlaneseq
        %v827 = vshrl.u32 %v826, 7
        %v828 = vsub.s32 3, %v827
        %v829 = vrot.slane %v812, %v828
        %v834 = vpack.c.bf16 %v817, %v817
        %v835 = vpack.c.bf16 %v821, %v821
        %v836 = vpack.c.bf16 %v825, %v825
        %v837 = vpack.c.bf16 %v829, %v829
        %v839 = vpack.i.b16 %v834, %v834
        %v841 = vlaneseq
        %v842 = vshrl.u32 %v841, 7
        %v843 = vsub.s32 0, %v842
        %v844 = vrot.slane %v839, %v843
        %v846 = vpack.i.b16 %v835, %v835
        %v848 = vlaneseq
        %v849 = vshrl.u32 %v848, 7
        %v850 = vsub.s32 0, %v849
        %v851 = vrot.slane %v846, %v850
        %v853 = vpack.i.b16 %v836, %v836
        %v855 = vlaneseq
        %v856 = vshrl.u32 %v855, 7
        %v857 = vsub.s32 0, %v856
        %v858 = vrot.slane %v853, %v857
        %v860 = vpack.i.b16 %v837, %v837
        %v862 = vlaneseq
        %v863 = vshrl.u32 %v862, 7
        %v864 = vsub.s32 0, %v863
        %v865 = vrot.slane %v860, %v864
        %v866 = vadd.bf16 %v780, %v844
        %v867 = vadd.bf16 %v781, %v851
        %v868 = vadd.bf16 %v782, %v858
        %v869 = vadd.bf16 %v783, %v865
        %v870 = vadd.bf16 %v784, %v844
        %v871 = vadd.bf16 %v785, %v851
        %v872 = vadd.bf16 %v786, %v858
        %v873 = vadd.bf16 %v787, %v865
        %v874 = vadd.bf16 %v788, %v844
        %v875 = vadd.bf16 %v789, %v851
        %v876 = vadd.bf16 %v790, %v858
        %v877 = vadd.bf16 %v791, %v865
        %v878 = vadd.bf16 %v792, %v844
        %v879 = vadd.bf16 %v793, %v851
        %v880 = vadd.bf16 %v794, %v858
        %v881 = vadd.bf16 %v795, %v865
        %v882 = vadd.bf16 %v796, %v844
        %v883 = vadd.bf16 %v797, %v851
        %v884 = vadd.bf16 %v798, %v858
        %v885 = vadd.bf16 %v799, %v865
        %v886 = vadd.bf16 %v800, %v844
        %v887 = vadd.bf16 %v801, %v851
        %v888 = vadd.bf16 %v802, %v858
        %v889 = vadd.bf16 %v803, %v865
        %v890 = vadd.bf16 %v804, %v844
        %v891 = vadd.bf16 %v805, %v851
        %v892 = vadd.bf16 %v806, %v858
        %v893 = vadd.bf16 %v807, %v865
        %v894 = vadd.bf16 %v808, %v844
        %v895 = vadd.bf16 %v809, %v851
        %v896 = vadd.bf16 %v810, %v858
        %v897 = vadd.bf16 %v811, %v865
        %v898 = vmax.bf16 %v866, 0
        %v899 = vmax.bf16 %v867, 0
        %v900 = vmax.bf16 %v868, 0
        %v901 = vmax.bf16 %v869, 0
        %v902 = vmax.bf16 %v870, 0
        %v903 = vmax.bf16 %v871, 0
        %v904 = vmax.bf16 %v872, 0
        %v905 = vmax.bf16 %v873, 0
        %v906 = vmax.bf16 %v874, 0
        %v907 = vmax.bf16 %v875, 0
        %v908 = vmax.bf16 %v876, 0
        %v909 = vmax.bf16 %v877, 0
        %v910 = vmax.bf16 %v878, 0
        %v911 = vmax.bf16 %v879, 0
        %v912 = vmax.bf16 %v880, 0
        %v913 = vmax.bf16 %v881, 0
        %v914 = vmax.bf16 %v882, 0
        %v915 = vmax.bf16 %v883, 0
        %v916 = vmax.bf16 %v884, 0
        %v917 = vmax.bf16 %v885, 0
        %v918 = vmax.bf16 %v886, 0
        %v919 = vmax.bf16 %v887, 0
        %v920 = vmax.bf16 %v888, 0
        %v921 = vmax.bf16 %v889, 0
        %v922 = vmax.bf16 %v890, 0
        %v923 = vmax.bf16 %v891, 0
        %v924 = vmax.bf16 %v892, 0
        %v925 = vmax.bf16 %v893, 0
        %v926 = vmax.bf16 %v894, 0
        %v927 = vmax.bf16 %v895, 0
        %v928 = vmax.bf16 %v896, 0
        %v929 = vmax.bf16 %v897, 0
        %v930 = vld [vmem:[#allocation2] sm:$0xff]
        %v931 = vld [vmem:[#allocation2 + $0x8] sm:$0xff]
        %v932 = vld [vmem:[#allocation2 + $0x10] sm:$0xff]
        %v933 = vld [vmem:[#allocation2 + $0x18] sm:$0xff]
        %v934 = vld [vmem:[#allocation2 + $0x20] sm:$0xff]
        %v935 = vld [vmem:[#allocation2 + $0x28] sm:$0xff]
        %v936 = vld [vmem:[#allocation2 + $0x30] sm:$0xff]
        %v937 = vld [vmem:[#allocation2 + $0x38] sm:$0xff]
        %v938 = vld [vmem:[#allocation2 + $0x40] sm:$0xff]
        %v939 = vld [vmem:[#allocation2 + $0x48] sm:$0xff]
        %v940 = vld [vmem:[#allocation2 + $0x50] sm:$0xff]
        %v941 = vld [vmem:[#allocation2 + $0x58] sm:$0xff]
        %v942 = vld [vmem:[#allocation2 + $0x60] sm:$0xff]
        %v943 = vld [vmem:[#allocation2 + $0x68] sm:$0xff]
        %v944 = vld [vmem:[#allocation2 + $0x70] sm:$0xff]
        %v945 = vld [vmem:[#allocation2 + $0x78] sm:$0xff]
        %v946 = vld [vmem:[#allocation2 + $0x80] sm:$0xff]
        %v947 = vld [vmem:[#allocation2 + $0x88] sm:$0xff]
        %v948 = vld [vmem:[#allocation2 + $0x90] sm:$0xff]
        %v949 = vld [vmem:[#allocation2 + $0x98] sm:$0xff]
        %v950 = vld [vmem:[#allocation2 + $0xa0] sm:$0xff]
        %v951 = vld [vmem:[#allocation2 + $0xa8] sm:$0xff]
        %v952 = vld [vmem:[#allocation2 + $0xb0] sm:$0xff]
        %v953 = vld [vmem:[#allocation2 + $0xb8] sm:$0xff]
        %v954 = vld [vmem:[#allocation2 + $0xc0] sm:$0xff]
        %v955 = vld [vmem:[#allocation2 + $0xc8] sm:$0xff]
        %v956 = vld [vmem:[#allocation2 + $0xd0] sm:$0xff]
        %v957 = vld [vmem:[#allocation2 + $0xd8] sm:$0xff]
        %v958 = vld [vmem:[#allocation2 + $0xe0] sm:$0xff]
        %v959 = vld [vmem:[#allocation2 + $0xe8] sm:$0xff]
        %v960 = vld [vmem:[#allocation2 + $0xf0] sm:$0xff]
        %v961 = vld [vmem:[#allocation2 + $0xf8] sm:$0xff]
        %v962 = vld [vmem:[#allocation2 + $0x100] sm:$0xff]
        %v963 = vld [vmem:[#allocation2 + $0x108] sm:$0xff]
        %v964 = vld [vmem:[#allocation2 + $0x110] sm:$0xff]
        %v965 = vld [vmem:[#allocation2 + $0x118] sm:$0xff]
        %v966 = vld [vmem:[#allocation2 + $0x120] sm:$0xff]
        %v967 = vld [vmem:[#allocation2 + $0x128] sm:$0xff]
        %v968 = vld [vmem:[#allocation2 + $0x130] sm:$0xff]
        %v969 = vld [vmem:[#allocation2 + $0x138] sm:$0xff]
        %v970 = vld [vmem:[#allocation2 + $0x140] sm:$0xff]
        %v971 = vld [vmem:[#allocation2 + $0x148] sm:$0xff]
        %v972 = vld [vmem:[#allocation2 + $0x150] sm:$0xff]
        %v973 = vld [vmem:[#allocation2 + $0x158] sm:$0xff]
        %v974 = vld [vmem:[#allocation2 + $0x160] sm:$0xff]
        %v975 = vld [vmem:[#allocation2 + $0x168] sm:$0xff]
        %v976 = vld [vmem:[#allocation2 + $0x170] sm:$0xff]
        %v977 = vld [vmem:[#allocation2 + $0x178] sm:$0xff]
        %v978 = vld [vmem:[#allocation2 + $0x180] sm:$0xff]
        %v979 = vld [vmem:[#allocation2 + $0x188] sm:$0xff]
        %v980 = vld [vmem:[#allocation2 + $0x190] sm:$0xff]
        %v981 = vld [vmem:[#allocation2 + $0x198] sm:$0xff]
        %v982 = vld [vmem:[#allocation2 + $0x1a0] sm:$0xff]
        %v983 = vld [vmem:[#allocation2 + $0x1a8] sm:$0xff]
        %v984 = vld [vmem:[#allocation2 + $0x1b0] sm:$0xff]
        %v985 = vld [vmem:[#allocation2 + $0x1b8] sm:$0xff]
        %v986 = vld [vmem:[#allocation2 + $0x1c0] sm:$0xff]
        %v987 = vld [vmem:[#allocation2 + $0x1c8] sm:$0xff]
        %v988 = vld [vmem:[#allocation2 + $0x1d0] sm:$0xff]
        %v989 = vld [vmem:[#allocation2 + $0x1d8] sm:$0xff]
        %v990 = vld [vmem:[#allocation2 + $0x1e0] sm:$0xff]
        %v991 = vld [vmem:[#allocation2 + $0x1e8] sm:$0xff]
        %v992 = vld [vmem:[#allocation2 + $0x1f0] sm:$0xff]
        %v993 = vld [vmem:[#allocation2 + $0x1f8] sm:$0xff]
        %v1058 = vunpack.c.l.b16 %v930
        %v1059 = vunpack.c.h.b16 %v930
        %v1060 = vunpack.c.l.b16 %v931
        %v1061 = vunpack.c.h.b16 %v931
        %v1062 = vunpack.c.l.b16 %v932
        %v1063 = vunpack.c.h.b16 %v932
        %v1064 = vunpack.c.l.b16 %v933
        %v1065 = vunpack.c.h.b16 %v933
        %v1066 = vunpack.c.l.b16 %v934
        %v1067 = vunpack.c.h.b16 %v934
        %v1068 = vunpack.c.l.b16 %v935
        %v1069 = vunpack.c.h.b16 %v935
        %v1070 = vunpack.c.l.b16 %v936
        %v1071 = vunpack.c.h.b16 %v936
        %v1072 = vunpack.c.l.b16 %v937
        %v1073 = vunpack.c.h.b16 %v937
        %v1074 = vunpack.c.l.b16 %v938
        %v1075 = vunpack.c.h.b16 %v938
        %v1076 = vunpack.c.l.b16 %v939
        %v1077 = vunpack.c.h.b16 %v939
        %v1078 = vunpack.c.l.b16 %v940
        %v1079 = vunpack.c.h.b16 %v940
        %v1080 = vunpack.c.l.b16 %v941
        %v1081 = vunpack.c.h.b16 %v941
        %v1082 = vunpack.c.l.b16 %v942
        %v1083 = vunpack.c.h.b16 %v942
        %v1084 = vunpack.c.l.b16 %v943
        %v1085 = vunpack.c.h.b16 %v943
        %v1086 = vunpack.c.l.b16 %v944
        %v1087 = vunpack.c.h.b16 %v944
        %v1088 = vunpack.c.l.b16 %v945
        %v1089 = vunpack.c.h.b16 %v945
        %v1090 = vunpack.c.l.b16 %v946
        %v1091 = vunpack.c.h.b16 %v946
        %v1092 = vunpack.c.l.b16 %v947
        %v1093 = vunpack.c.h.b16 %v947
        %v1094 = vunpack.c.l.b16 %v948
        %v1095 = vunpack.c.h.b16 %v948
        %v1096 = vunpack.c.l.b16 %v949
        %v1097 = vunpack.c.h.b16 %v949
        %v1098 = vunpack.c.l.b16 %v950
        %v1099 = vunpack.c.h.b16 %v950
        %v1100 = vunpack.c.l.b16 %v951
        %v1101 = vunpack.c.h.b16 %v951
        %v1102 = vunpack.c.l.b16 %v952
        %v1103 = vunpack.c.h.b16 %v952
        %v1104 = vunpack.c.l.b16 %v953
        %v1105 = vunpack.c.h.b16 %v953
        %v1106 = vunpack.c.l.b16 %v954
        %v1107 = vunpack.c.h.b16 %v954
        %v1108 = vunpack.c.l.b16 %v955
        %v1109 = vunpack.c.h.b16 %v955
        %v1110 = vunpack.c.l.b16 %v956
        %v1111 = vunpack.c.h.b16 %v956
        %v1112 = vunpack.c.l.b16 %v957
        %v1113 = vunpack.c.h.b16 %v957
        %v1114 = vunpack.c.l.b16 %v958
        %v1115 = vunpack.c.h.b16 %v958
        %v1116 = vunpack.c.l.b16 %v959
        %v1117 = vunpack.c.h.b16 %v959
        %v1118 = vunpack.c.l.b16 %v960
        %v1119 = vunpack.c.h.b16 %v960
        %v1120 = vunpack.c.l.b16 %v961
        %v1121 = vunpack.c.h.b16 %v961
        %v1122 = vunpack.c.l.b16 %v962
        %v1123 = vunpack.c.h.b16 %v962
        %v1124 = vunpack.c.l.b16 %v963
        %v1125 = vunpack.c.h.b16 %v963
        %v1126 = vunpack.c.l.b16 %v964
        %v1127 = vunpack.c.h.b16 %v964
        %v1128 = vunpack.c.l.b16 %v965
        %v1129 = vunpack.c.h.b16 %v965
        %v1130 = vunpack.c.l.b16 %v966
        %v1131 = vunpack.c.h.b16 %v966
        %v1132 = vunpack.c.l.b16 %v967
        %v1133 = vunpack.c.h.b16 %v967
        %v1134 = vunpack.c.l.b16 %v968
        %v1135 = vunpack.c.h.b16 %v968
        %v1136 = vunpack.c.l.b16 %v969
        %v1137 = vunpack.c.h.b16 %v969
        %v1138 = vunpack.c.l.b16 %v970
        %v1139 = vunpack.c.h.b16 %v970
        %v1140 = vunpack.c.l.b16 %v971
        %v1141 = vunpack.c.h.b16 %v971
        %v1142 = vunpack.c.l.b16 %v972
        %v1143 = vunpack.c.h.b16 %v972
        %v1144 = vunpack.c.l.b16 %v973
        %v1145 = vunpack.c.h.b16 %v973
        %v1146 = vunpack.c.l.b16 %v974
        %v1147 = vunpack.c.h.b16 %v974
        %v1148 = vunpack.c.l.b16 %v975
        %v1149 = vunpack.c.h.b16 %v975
        %v1150 = vunpack.c.l.b16 %v976
        %v1151 = vunpack.c.h.b16 %v976
        %v1152 = vunpack.c.l.b16 %v977
        %v1153 = vunpack.c.h.b16 %v977
        %v1154 = vunpack.c.l.b16 %v978
        %v1155 = vunpack.c.h.b16 %v978
        %v1156 = vunpack.c.l.b16 %v979
        %v1157 = vunpack.c.h.b16 %v979
        %v1158 = vunpack.c.l.b16 %v980
        %v1159 = vunpack.c.h.b16 %v980
        %v1160 = vunpack.c.l.b16 %v981
        %v1161 = vunpack.c.h.b16 %v981
        %v1162 = vunpack.c.l.b16 %v982
        %v1163 = vunpack.c.h.b16 %v982
        %v1164 = vunpack.c.l.b16 %v983
        %v1165 = vunpack.c.h.b16 %v983
        %v1166 = vunpack.c.l.b16 %v984
        %v1167 = vunpack.c.h.b16 %v984
        %v1168 = vunpack.c.l.b16 %v985
        %v1169 = vunpack.c.h.b16 %v985
        %v1170 = vunpack.c.l.b16 %v986
        %v1171 = vunpack.c.h.b16 %v986
        %v1172 = vunpack.c.l.b16 %v987
        %v1173 = vunpack.c.h.b16 %v987
        %v1174 = vunpack.c.l.b16 %v988
        %v1175 = vunpack.c.h.b16 %v988
        %v1176 = vunpack.c.l.b16 %v989
        %v1177 = vunpack.c.h.b16 %v989
        %v1178 = vunpack.c.l.b16 %v990
        %v1179 = vunpack.c.h.b16 %v990
        %v1180 = vunpack.c.l.b16 %v991
        %v1181 = vunpack.c.h.b16 %v991
        %v1182 = vunpack.c.l.b16 %v992
        %v1183 = vunpack.c.h.b16 %v992
        %v1184 = vunpack.c.l.b16 %v993
        %v1185 = vunpack.c.h.b16 %v993
        %v1186 = vpack.c.b16 %v1060, %v1058
        %v1187 = vpack.c.b16 %v1061, %v1059
        %v1188 = vpack.c.b16 %v1064, %v1062
        %v1189 = vpack.c.b16 %v1065, %v1063
        %v1190 = vpack.c.b16 %v1068, %v1066
        %v1191 = vpack.c.b16 %v1069, %v1067
        %v1192 = vpack.c.b16 %v1072, %v1070
        %v1193 = vpack.c.b16 %v1073, %v1071
        %v1194 = vpack.c.b16 %v1076, %v1074
        %v1195 = vpack.c.b16 %v1077, %v1075
        %v1196 = vpack.c.b16 %v1080, %v1078
        %v1197 = vpack.c.b16 %v1081, %v1079
        %v1198 = vpack.c.b16 %v1084, %v1082
        %v1199 = vpack.c.b16 %v1085, %v1083
        %v1200 = vpack.c.b16 %v1088, %v1086
        %v1201 = vpack.c.b16 %v1089, %v1087
        %v1202 = vpack.c.b16 %v1092, %v1090
        %v1203 = vpack.c.b16 %v1093, %v1091
        %v1204 = vpack.c.b16 %v1096, %v1094
        %v1205 = vpack.c.b16 %v1097, %v1095
        %v1206 = vpack.c.b16 %v1100, %v1098
        %v1207 = vpack.c.b16 %v1101, %v1099
        %v1208 = vpack.c.b16 %v1104, %v1102
        %v1209 = vpack.c.b16 %v1105, %v1103
        %v1210 = vpack.c.b16 %v1108, %v1106
        %v1211 = vpack.c.b16 %v1109, %v1107
        %v1212 = vpack.c.b16 %v1112, %v1110
        %v1213 = vpack.c.b16 %v1113, %v1111
        %v1214 = vpack.c.b16 %v1116, %v1114
        %v1215 = vpack.c.b16 %v1117, %v1115
        %v1216 = vpack.c.b16 %v1120, %v1118
        %v1217 = vpack.c.b16 %v1121, %v1119
        %v1218 = vpack.c.b16 %v1124, %v1122
        %v1219 = vpack.c.b16 %v1125, %v1123
        %v1220 = vpack.c.b16 %v1128, %v1126
        %v1221 = vpack.c.b16 %v1129, %v1127
        %v1222 = vpack.c.b16 %v1132, %v1130
        %v1223 = vpack.c.b16 %v1133, %v1131
        %v1224 = vpack.c.b16 %v1136, %v1134
        %v1225 = vpack.c.b16 %v1137, %v1135
        %v1226 = vpack.c.b16 %v1140, %v1138
        %v1227 = vpack.c.b16 %v1141, %v1139
        %v1228 = vpack.c.b16 %v1144, %v1142
        %v1229 = vpack.c.b16 %v1145, %v1143
        %v1230 = vpack.c.b16 %v1148, %v1146
        %v1231 = vpack.c.b16 %v1149, %v1147
        %v1232 = vpack.c.b16 %v1152, %v1150
        %v1233 = vpack.c.b16 %v1153, %v1151
        %v1234 = vpack.c.b16 %v1156, %v1154
        %v1235 = vpack.c.b16 %v1157, %v1155
        %v1236 = vpack.c.b16 %v1160, %v1158
        %v1237 = vpack.c.b16 %v1161, %v1159
        %v1238 = vpack.c.b16 %v1164, %v1162
        %v1239 = vpack.c.b16 %v1165, %v1163
        %v1240 = vpack.c.b16 %v1168, %v1166
        %v1241 = vpack.c.b16 %v1169, %v1167
        %v1242 = vpack.c.b16 %v1172, %v1170
        %v1243 = vpack.c.b16 %v1173, %v1171
        %v1244 = vpack.c.b16 %v1176, %v1174
        %v1245 = vpack.c.b16 %v1177, %v1175
        %v1246 = vpack.c.b16 %v1180, %v1178
        %v1247 = vpack.c.b16 %v1181, %v1179
        %v1248 = vpack.c.b16 %v1184, %v1182
        %v1249 = vpack.c.b16 %v1185, %v1183
        %1314 = vmatprep.subr.bf16.mxu0 %v1187
        %1315 = vmatpush1.bf16.msra.mxu0 %v1186
        %1316 = vmatprep.subr.bf16.mxu0 %v1189
        %1317 = vmatpush1.bf16.msra.mxu0 %v1188
        %1318 = vmatprep.subr.bf16.mxu0 %v1191
        %1319 = vmatpush1.bf16.msra.mxu0 %v1190
        %1320 = vmatprep.subr.bf16.mxu0 %v1193
        %1321 = vmatpush1.bf16.msra.mxu0 %v1192
        %1322 = vmatprep.subr.bf16.mxu0 %v1195
        %1323 = vmatpush1.bf16.msra.mxu0 %v1194
        %1324 = vmatprep.subr.bf16.mxu0 %v1197
        %1325 = vmatpush1.bf16.msra.mxu0 %v1196
        %1326 = vmatprep.subr.bf16.mxu0 %v1199
        %1327 = vmatpush1.bf16.msra.mxu0 %v1198
        %1328 = vmatprep.subr.bf16.mxu0 %v1201
        %1329 = vmatpush1.bf16.msra.mxu0 %v1200
        %1330 = vmatprep.subr.bf16.mxu0 %v1203
        %1331 = vmatpush1.bf16.msra.mxu0 %v1202
        %1332 = vmatprep.subr.bf16.mxu0 %v1205
        %1333 = vmatpush1.bf16.msra.mxu0 %v1204
        %1334 = vmatprep.subr.bf16.mxu0 %v1207
        %1335 = vmatpush1.bf16.msra.mxu0 %v1206
        %1336 = vmatprep.subr.bf16.mxu0 %v1209
        %1337 = vmatpush1.bf16.msra.mxu0 %v1208
        %1338 = vmatprep.subr.bf16.mxu0 %v1211
        %1339 = vmatpush1.bf16.msra.mxu0 %v1210
        %1340 = vmatprep.subr.bf16.mxu0 %v1213
        %1341 = vmatpush1.bf16.msra.mxu0 %v1212
        %1342 = vmatprep.subr.bf16.mxu0 %v1215
        %1343 = vmatpush1.bf16.msra.mxu0 %v1214
        %1344 = vmatprep.subr.bf16.mxu0 %v1217
        %1345 = vmatpush1.bf16.msra.mxu0 %v1216
        %1346 = vmatprep.mubr.bf16.mxu0 %v899
        %1347 = vmatmul.mubr.bf16.gmra.mrb[0].mxu0 %v898
        %v1348 = vpop.f32.mrb[0].mxu0
        %v1349 = vadd.f32 0.0, %v1348
        %v1350 = vpop.f32.mrb[0].mxu0
        %v1351 = vadd.f32 0.0, %v1350
        %v1352 = vpop.f32.mrb[0].mxu0
        %v1353 = vadd.f32 0.0, %v1352
        %v1354 = vpop.f32.mrb[0].mxu0
        %v1355 = vadd.f32 0.0, %v1354
        %1356 = vmatprep.mubr.bf16.mxu0 %v903
        %1357 = vmatmul.mubr.bf16.gmra.mrb[0].mxu0 %v902
        %v1358 = vpop.f32.mrb[0].mxu0
        %v1359 = vadd.f32 0.0, %v1358
        %v1360 = vpop.f32.mrb[0].mxu0
        %v1361 = vadd.f32 0.0, %v1360
        %v1362 = vpop.f32.mrb[0].mxu0
        %v1363 = vadd.f32 0.0, %v1362
        %v1364 = vpop.f32.mrb[0].mxu0
        %v1365 = vadd.f32 0.0, %v1364
        %1366 = vmatprep.mubr.bf16.mxu0 %v907
        %1367 = vmatmul.mubr.bf16.gmra.mrb[0].mxu0 %v906
        %v1368 = vpop.f32.mrb[0].mxu0
        %v1369 = vadd.f32 0.0, %v1368
        %v1370 = vpop.f32.mrb[0].mxu0
        %v1371 = vadd.f32 0.0, %v1370
        %v1372 = vpop.f32.mrb[0].mxu0
        %v1373 = vadd.f32 0.0, %v1372
        %v1374 = vpop.f32.mrb[0].mxu0
        %v1375 = vadd.f32 0.0, %v1374
        %1376 = vmatprep.mubr.bf16.mxu0 %v911
        %1377 = vmatmul.mubr.bf16.gmra.mrb[0].mxu0 %v910
        %v1378 = vpop.f32.mrb[0].mxu0
        %v1379 = vadd.f32 0.0, %v1378
        %v1380 = vpop.f32.mrb[0].mxu0
        %v1381 = vadd.f32 0.0, %v1380
        %v1382 = vpop.f32.mrb[0].mxu0
        %v1383 = vadd.f32 0.0, %v1382
        %v1384 = vpop.f32.mrb[0].mxu0
        %v1385 = vadd.f32 0.0, %v1384
        %1386 = vmatprep.mubr.bf16.mxu0 %v915
        %1387 = vmatmul.mubr.bf16.gmra.mrb[0].mxu0 %v914
        %v1388 = vpop.f32.mrb[0].mxu0
        %v1389 = vadd.f32 0.0, %v1388
        %v1390 = vpop.f32.mrb[0].mxu0
        %v1391 = vadd.f32 0.0, %v1390
        %v1392 = vpop.f32.mrb[0].mxu0
        %v1393 = vadd.f32 0.0, %v1392
        %v1394 = vpop.f32.mrb[0].mxu0
        %v1395 = vadd.f32 0.0, %v1394
        %1396 = vmatprep.mubr.bf16.mxu0 %v919
        %1397 = vmatmul.mubr.bf16.gmra.mrb[0].mxu0 %v918
        %v1398 = vpop.f32.mrb[0].mxu0
        %v1399 = vadd.f32 0.0, %v1398
        %v1400 = vpop.f32.mrb[0].mxu0
        %v1401 = vadd.f32 0.0, %v1400
        %v1402 = vpop.f32.mrb[0].mxu0
        %v1403 = vadd.f32 0.0, %v1402
        %v1404 = vpop.f32.mrb[0].mxu0
        %v1405 = vadd.f32 0.0, %v1404
        %1406 = vmatprep.mubr.bf16.mxu0 %v923
        %1407 = vmatmul.mubr.bf16.gmra.mrb[0].mxu0 %v922
        %v1408 = vpop.f32.mrb[0].mxu0
        %v1409 = vadd.f32 0.0, %v1408
        %v1410 = vpop.f32.mrb[0].mxu0
        %v1411 = vadd.f32 0.0, %v1410
        %v1412 = vpop.f32.mrb[0].mxu0
        %v1413 = vadd.f32 0.0, %v1412
        %v1414 = vpop.f32.mrb[0].mxu0
        %v1415 = vadd.f32 0.0, %v1414
        %1416 = vmatprep.mubr.bf16.mxu0 %v927
        %1417 = vmatmul.mubr.bf16.gmra.mrb[0].mxu0 %v926
        %v1418 = vpop.f32.mrb[0].mxu0
        %v1419 = vadd.f32 0.0, %v1418
        %v1420 = vpop.f32.mrb[0].mxu0
        %v1421 = vadd.f32 0.0, %v1420
        %v1422 = vpop.f32.mrb[0].mxu0
        %v1423 = vadd.f32 0.0, %v1422
        %v1424 = vpop.f32.mrb[0].mxu0
        %v1425 = vadd.f32 0.0, %v1424
        %1426 = vdwg.mxu0
        %1427 = vmatprep.subr.bf16.mxu0 %v1219
        %1428 = vmatpush1.bf16.msra.mxu0 %v1218
        %1429 = vmatprep.subr.bf16.mxu0 %v1221
        %1430 = vmatpush1.bf16.msra.mxu0 %v1220
        %1431 = vmatprep.subr.bf16.mxu0 %v1223
        %1432 = vmatpush1.bf16.msra.mxu0 %v1222
        %1433 = vmatprep.subr.bf16.mxu0 %v1225
        %1434 = vmatpush1.bf16.msra.mxu0 %v1224
        %1435 = vmatprep.subr.bf16.mxu0 %v1227
        %1436 = vmatpush1.bf16.msra.mxu0 %v1226
        %1437 = vmatprep.subr.bf16.mxu0 %v1229
        %1438 = vmatpush1.bf16.msra.mxu0 %v1228
        %1439 = vmatprep.subr.bf16.mxu0 %v1231
        %1440 = vmatpush1.bf16.msra.mxu0 %v1230
        %1441 = vmatprep.subr.bf16.mxu0 %v1233
        %1442 = vmatpush1.bf16.msra.mxu0 %v1232
        %1443 = vmatprep.subr.bf16.mxu0 %v1235
        %1444 = vmatpush1.bf16.msra.mxu0 %v1234
        %1445 = vmatprep.subr.bf16.mxu0 %v1237
        %1446 = vmatpush1.bf16.msra.mxu0 %v1236
        %1447 = vmatprep.subr.bf16.mxu0 %v1239
        %1448 = vmatpush1.bf16.msra.mxu0 %v1238
        %1449 = vmatprep.subr.bf16.mxu0 %v1241
        %1450 = vmatpush1.bf16.msra.mxu0 %v1240
        %1451 = vmatprep.subr.bf16.mxu0 %v1243
        %1452 = vmatpush1.bf16.msra.mxu0 %v1242
        %1453 = vmatprep.subr.bf16.mxu0 %v1245
        %1454 = vmatpush1.bf16.msra.mxu0 %v1244
        %1455 = vmatprep.subr.bf16.mxu0 %v1247
        %1456 = vmatpush1.bf16.msra.mxu0 %v1246
        %1457 = vmatprep.subr.bf16.mxu0 %v1249
        %1458 = vmatpush1.bf16.msra.mxu0 %v1248
        %1459 = vmatprep.mubr.bf16.mxu0 %v901
        %1460 = vmatmul.mubr.bf16.gmra.mrb[0].mxu0 %v900
        %v1461 = vpop.f32.mrb[0].mxu0
        %v1462 = vadd.f32 %v1349, %v1461
        %v1463 = vpop.f32.mrb[0].mxu0
        %v1464 = vadd.f32 %v1351, %v1463
        %v1465 = vpop.f32.mrb[0].mxu0
        %v1466 = vadd.f32 %v1353, %v1465
        %v1467 = vpop.f32.mrb[0].mxu0
        %v1468 = vadd.f32 %v1355, %v1467
        %1469 = vmatprep.mubr.bf16.mxu0 %v905
        %1470 = vmatmul.mubr.bf16.gmra.mrb[0].mxu0 %v904
        %v1471 = vpop.f32.mrb[0].mxu0
        %v1472 = vadd.f32 %v1359, %v1471
        %v1473 = vpop.f32.mrb[0].mxu0
        %v1474 = vadd.f32 %v1361, %v1473
        %v1475 = vpop.f32.mrb[0].mxu0
        %v1476 = vadd.f32 %v1363, %v1475
        %v1477 = vpop.f32.mrb[0].mxu0
        %v1478 = vadd.f32 %v1365, %v1477
        %1479 = vmatprep.mubr.bf16.mxu0 %v909
        %1480 = vmatmul.mubr.bf16.gmra.mrb[0].mxu0 %v908
        %v1481 = vpop.f32.mrb[0].mxu0
        %v1482 = vadd.f32 %v1369, %v1481
        %v1483 = vpop.f32.mrb[0].mxu0
        %v1484 = vadd.f32 %v1371, %v1483
        %v1485 = vpop.f32.mrb[0].mxu0
        %v1486 = vadd.f32 %v1373, %v1485
        %v1487 = vpop.f32.mrb[0].mxu0
        %v1488 = vadd.f32 %v1375, %v1487
        %1489 = vmatprep.mubr.bf16.mxu0 %v913
        %1490 = vmatmul.mubr.bf16.gmra.mrb[0].mxu0 %v912
        %v1491 = vpop.f32.mrb[0].mxu0
        %v1492 = vadd.f32 %v1379, %v1491
        %v1493 = vpop.f32.mrb[0].mxu0
        %v1494 = vadd.f32 %v1381, %v1493
        %v1495 = vpop.f32.mrb[0].mxu0
        %v1496 = vadd.f32 %v1383, %v1495
        %v1497 = vpop.f32.mrb[0].mxu0
        %v1498 = vadd.f32 %v1385, %v1497
        %1499 = vmatprep.mubr.bf16.mxu0 %v917
        %1500 = vmatmul.mubr.bf16.gmra.mrb[0].mxu0 %v916
        %v1501 = vpop.f32.mrb[0].mxu0
        %v1502 = vadd.f32 %v1389, %v1501
        %v1503 = vpop.f32.mrb[0].mxu0
        %v1504 = vadd.f32 %v1391, %v1503
        %v1505 = vpop.f32.mrb[0].mxu0
        %v1506 = vadd.f32 %v1393, %v1505
        %v1507 = vpop.f32.mrb[0].mxu0
        %v1508 = vadd.f32 %v1395, %v1507
        %1509 = vmatprep.mubr.bf16.mxu0 %v921
        %1510 = vmatmul.mubr.bf16.gmra.mrb[0].mxu0 %v920
        %v1511 = vpop.f32.mrb[0].mxu0
        %v1512 = vadd.f32 %v1399, %v1511
        %v1513 = vpop.f32.mrb[0].mxu0
        %v1514 = vadd.f32 %v1401, %v1513
        %v1515 = vpop.f32.mrb[0].mxu0
        %v1516 = vadd.f32 %v1403, %v1515
        %v1517 = vpop.f32.mrb[0].mxu0
        %v1518 = vadd.f32 %v1405, %v1517
        %1519 = vmatprep.mubr.bf16.mxu0 %v925
        %1520 = vmatmul.mubr.bf16.gmra.mrb[0].mxu0 %v924
        %v1521 = vpop.f32.mrb[0].mxu0
        %v1522 = vadd.f32 %v1409, %v1521
        %v1523 = vpop.f32.mrb[0].mxu0
        %v1524 = vadd.f32 %v1411, %v1523
        %v1525 = vpop.f32.mrb[0].mxu0
        %v1526 = vadd.f32 %v1413, %v1525
        %v1527 = vpop.f32.mrb[0].mxu0
        %v1528 = vadd.f32 %v1415, %v1527
        %1529 = vmatprep.mubr.bf16.mxu0 %v929
        %1530 = vmatmul.mubr.bf16.gmra.mrb[0].mxu0 %v928
        %v1531 = vpop.f32.mrb[0].mxu0
        %v1532 = vadd.f32 %v1419, %v1531
        %v1533 = vpop.f32.mrb[0].mxu0
        %v1534 = vadd.f32 %v1421, %v1533
        %v1535 = vpop.f32.mrb[0].mxu0
        %v1536 = vadd.f32 %v1423, %v1535
        %v1537 = vpop.f32.mrb[0].mxu0
        %v1538 = vadd.f32 %v1425, %v1537
        %1539 = vdwg.mxu0
        %v1540 = vpack.c.bf16 %v1466, %v1462
        %v1541 = vpack.c.bf16 %v1468, %v1464
        %v1542 = vpack.c.bf16 %v1476, %v1472
        %v1543 = vpack.c.bf16 %v1478, %v1474
        %v1544 = vpack.c.bf16 %v1486, %v1482
        %v1545 = vpack.c.bf16 %v1488, %v1484
        %v1546 = vpack.c.bf16 %v1496, %v1492
        %v1547 = vpack.c.bf16 %v1498, %v1494
        %v1548 = vpack.c.bf16 %v1506, %v1502
        %v1549 = vpack.c.bf16 %v1508, %v1504
        %v1550 = vpack.c.bf16 %v1516, %v1512
        %v1551 = vpack.c.bf16 %v1518, %v1514
        %v1552 = vpack.c.bf16 %v1526, %v1522
        %v1553 = vpack.c.bf16 %v1528, %v1524
        %v1554 = vpack.c.bf16 %v1536, %v1532
        %v1555 = vpack.c.bf16 %v1538, %v1534
        %v1556 = vld [vmem:[%s4] sm:$0x3]
        %v1558 = vlaneseq
        %v1559 = vshrl.u32 %v1558, 7
        %v1560 = vsub.s32 0, %v1559
        %v1561 = vrot.slane %v1556, %v1560
        %v1562 = vlaneseq
        %v1563 = vshrl.u32 %v1562, 7
        %v1564 = vsub.s32 1, %v1563
        %v1565 = vrot.slane %v1556, %v1564
        %v1568 = vpack.c.bf16 %v1561, %v1561
        %v1569 = vpack.c.bf16 %v1565, %v1565
        %v1571 = vpack.i.b16 %v1568, %v1568
        %v1573 = vlaneseq
        %v1574 = vshrl.u32 %v1573, 7
        %v1575 = vsub.s32 0, %v1574
        %v1576 = vrot.slane %v1571, %v1575
        %v1578 = vpack.i.b16 %v1569, %v1569
        %v1580 = vlaneseq
        %v1581 = vshrl.u32 %v1580, 7
        %v1582 = vsub.s32 0, %v1581
        %v1583 = vrot.slane %v1578, %v1582
        %v1584 = vadd.bf16 %v1540, %v1576
        %v1585 = vadd.bf16 %v1541, %v1583
        %v1586 = vadd.bf16 %v1542, %v1576
        %v1587 = vadd.bf16 %v1543, %v1583
        %v1588 = vadd.bf16 %v1544, %v1576
        %v1589 = vadd.bf16 %v1545, %v1583
        %v1590 = vadd.bf16 %v1546, %v1576
        %v1591 = vadd.bf16 %v1547, %v1583
        %v1592 = vadd.bf16 %v1548, %v1576
        %v1593 = vadd.bf16 %v1549, %v1583
        %v1594 = vadd.bf16 %v1550, %v1576
        %v1595 = vadd.bf16 %v1551, %v1583
        %v1596 = vadd.bf16 %v1552, %v1576
        %v1597 = vadd.bf16 %v1553, %v1583
        %v1598 = vadd.bf16 %v1554, %v1576
        %v1599 = vadd.bf16 %v1555, %v1583
        %v1600 = vmax.bf16 %v1584, 0
        %v1601 = vmax.bf16 %v1585, 0
        %v1602 = vmax.bf16 %v1586, 0
        %v1603 = vmax.bf16 %v1587, 0
        %v1604 = vmax.bf16 %v1588, 0
        %v1605 = vmax.bf16 %v1589, 0
        %v1606 = vmax.bf16 %v1590, 0
        %v1607 = vmax.bf16 %v1591, 0
        %v1608 = vmax.bf16 %v1592, 0
        %v1609 = vmax.bf16 %v1593, 0
        %v1610 = vmax.bf16 %v1594, 0
        %v1611 = vmax.bf16 %v1595, 0
        %v1612 = vmax.bf16 %v1596, 0
        %v1613 = vmax.bf16 %v1597, 0
        %v1614 = vmax.bf16 %v1598, 0
        %v1615 = vmax.bf16 %v1599, 0
        %v1616 = vld [vmem:[%s5] sm:$0xf]
        %v1617 = vld [vmem:[%s5 + $0x4] sm:$0xf]
        %v1618 = vld [vmem:[%s5 + $0x8] sm:$0xf]
        %v1619 = vld [vmem:[%s5 + $0xc] sm:$0xf]
        %v1620 = vld [vmem:[%s5 + $0x10] sm:$0xf]
        %v1621 = vld [vmem:[%s5 + $0x14] sm:$0xf]
        %v1622 = vld [vmem:[%s5 + $0x18] sm:$0xf]
        %v1623 = vld [vmem:[%s5 + $0x1c] sm:$0xf]
        %v1624 = vld [vmem:[%s5 + $0x20] sm:$0xf]
        %v1625 = vld [vmem:[%s5 + $0x24] sm:$0xf]
        %v1626 = vld [vmem:[%s5 + $0x28] sm:$0xf]
        %v1627 = vld [vmem:[%s5 + $0x2c] sm:$0xf]
        %v1628 = vld [vmem:[%s5 + $0x30] sm:$0xf]
        %v1629 = vld [vmem:[%s5 + $0x34] sm:$0xf]
        %v1630 = vld [vmem:[%s5 + $0x38] sm:$0xf]
        %v1631 = vld [vmem:[%s5 + $0x3c] sm:$0xf]
        %v1632 = vld [vmem:[%s5 + $0x40] sm:$0xf]
        %v1633 = vld [vmem:[%s5 + $0x44] sm:$0xf]
        %v1634 = vld [vmem:[%s5 + $0x48] sm:$0xf]
        %v1635 = vld [vmem:[%s5 + $0x4c] sm:$0xf]
        %v1636 = vld [vmem:[%s5 + $0x50] sm:$0xf]
        %v1637 = vld [vmem:[%s5 + $0x54] sm:$0xf]
        %v1638 = vld [vmem:[%s5 + $0x58] sm:$0xf]
        %v1639 = vld [vmem:[%s5 + $0x5c] sm:$0xf]
        %v1640 = vld [vmem:[%s5 + $0x60] sm:$0xf]
        %v1641 = vld [vmem:[%s5 + $0x64] sm:$0xf]
        %v1642 = vld [vmem:[%s5 + $0x68] sm:$0xf]
        %v1643 = vld [vmem:[%s5 + $0x6c] sm:$0xf]
        %v1644 = vld [vmem:[%s5 + $0x70] sm:$0xf]
        %v1645 = vld [vmem:[%s5 + $0x74] sm:$0xf]
        %v1646 = vld [vmem:[%s5 + $0x78] sm:$0xf]
        %v1647 = vld [vmem:[%s5 + $0x7c] sm:$0xf]
        %v1648 = vld [vmem:[%s6] sm:$0x1]
        %v1650 = vlaneseq
        %v1651 = vshrl.u32 %v1650, 7
        %v1652 = vsub.s32 0, %v1651
        %v1653 = vrot.slane %v1648, %v1652
        %v1687 = vunpack.c.l.b16 %v1616
        %v1688 = vunpack.c.l.b16 %v1617
        %v1689 = vunpack.c.l.b16 %v1618
        %v1690 = vunpack.c.l.b16 %v1619
        %v1691 = vunpack.c.l.b16 %v1620
        %v1692 = vunpack.c.l.b16 %v1621
        %v1693 = vunpack.c.l.b16 %v1622
        %v1694 = vunpack.c.l.b16 %v1623
        %v1695 = vunpack.c.l.b16 %v1624
        %v1696 = vunpack.c.l.b16 %v1625
        %v1697 = vunpack.c.l.b16 %v1626
        %v1698 = vunpack.c.l.b16 %v1627
        %v1699 = vunpack.c.l.b16 %v1628
        %v1700 = vunpack.c.l.b16 %v1629
        %v1701 = vunpack.c.l.b16 %v1630
        %v1702 = vunpack.c.l.b16 %v1631
        %v1703 = vunpack.c.l.b16 %v1632
        %v1704 = vunpack.c.l.b16 %v1633
        %v1705 = vunpack.c.l.b16 %v1634
        %v1706 = vunpack.c.l.b16 %v1635
        %v1707 = vunpack.c.l.b16 %v1636
        %v1708 = vunpack.c.l.b16 %v1637
        %v1709 = vunpack.c.l.b16 %v1638
        %v1710 = vunpack.c.l.b16 %v1639
        %v1711 = vunpack.c.l.b16 %v1640
        %v1712 = vunpack.c.l.b16 %v1641
        %v1713 = vunpack.c.l.b16 %v1642
        %v1714 = vunpack.c.l.b16 %v1643
        %v1715 = vunpack.c.l.b16 %v1644
        %v1716 = vunpack.c.l.b16 %v1645
        %v1717 = vunpack.c.l.b16 %v1646
        %v1718 = vunpack.c.l.b16 %v1647
        %v1719 = vpack.c.b16 %v1688, %v1687
        %v1720 = vpack.c.b16 %v1690, %v1689
        %v1721 = vpack.c.b16 %v1692, %v1691
        %v1722 = vpack.c.b16 %v1694, %v1693
        %v1723 = vpack.c.b16 %v1696, %v1695
        %v1724 = vpack.c.b16 %v1698, %v1697
        %v1725 = vpack.c.b16 %v1700, %v1699
        %v1726 = vpack.c.b16 %v1702, %v1701
        %v1727 = vpack.c.b16 %v1704, %v1703
        %v1728 = vpack.c.b16 %v1706, %v1705
        %v1729 = vpack.c.b16 %v1708, %v1707
        %v1730 = vpack.c.b16 %v1710, %v1709
        %v1731 = vpack.c.b16 %v1712, %v1711
        %v1732 = vpack.c.b16 %v1714, %v1713
        %v1733 = vpack.c.b16 %v1716, %v1715
        %v1734 = vpack.c.b16 %v1718, %v1717
        %1751 = vmatprep.subr.bf16.mxu0 0
        %1752 = vmatpush1.bf16.msra.mxu0 %v1719
        %1753 = vmatprep.subr.bf16.mxu0 0
        %1754 = vmatpush1.bf16.msra.mxu0 %v1720
        %1755 = vmatprep.subr.bf16.mxu0 0
        %1756 = vmatpush1.bf16.msra.mxu0 %v1721
        %1757 = vmatprep.subr.bf16.mxu0 0
        %1758 = vmatpush1.bf16.msra.mxu0 %v1722
        %1759 = vmatprep.subr.bf16.mxu0 0
        %1760 = vmatpush1.bf16.msra.mxu0 %v1723
        %1761 = vmatprep.subr.bf16.mxu0 0
        %1762 = vmatpush1.bf16.msra.mxu0 %v1724
        %1763 = vmatprep.subr.bf16.mxu0 0
        %1764 = vmatpush1.bf16.msra.mxu0 %v1725
        %1765 = vmatprep.subr.bf16.mxu0 0
        %1766 = vmatpush1.bf16.msra.mxu0 %v1726
        %1767 = vmatprep.subr.bf16.mxu0 0
        %1768 = vmatpush1.bf16.msra.mxu0 %v1727
        %1769 = vmatprep.subr.bf16.mxu0 0
        %1770 = vmatpush1.bf16.msra.mxu0 %v1728
        %1771 = vmatprep.subr.bf16.mxu0 0
        %1772 = vmatpush1.bf16.msra.mxu0 %v1729
        %1773 = vmatprep.subr.bf16.mxu0 0
        %1774 = vmatpush1.bf16.msra.mxu0 %v1730
        %1775 = vmatprep.subr.bf16.mxu0 0
        %1776 = vmatpush1.bf16.msra.mxu0 %v1731
        %1777 = vmatprep.subr.bf16.mxu0 0
        %1778 = vmatpush1.bf16.msra.mxu0 %v1732
        %1779 = vmatprep.subr.bf16.mxu0 0
        %1780 = vmatpush1.bf16.msra.mxu0 %v1733
        %1781 = vmatprep.subr.bf16.mxu0 0
        %1782 = vmatpush1.bf16.msra.mxu0 %v1734
        %1783 = vmatprep.mubr.bf16.mxu0 %v1601
        %1784 = vmatmul.mubr.bf16.gmra.mrb[0].mxu0 %v1600
        %v1785 = vpop.f32.mrb[0].mxu0
        %v1786 = vadd.f32 %v1653, %v1785
        %v1787 = vpop.f32.mrb[0].mxu0
        %v1788 = vpop.f32.mrb[0].mxu0
        %v1789 = vadd.f32 %v1653, %v1788
        %v1790 = vpop.f32.mrb[0].mxu0
        %1791 = vmatprep.mubr.bf16.mxu0 %v1603
        %1792 = vmatmul.mubr.bf16.gmra.mrb[0].mxu0 %v1602
        %v1793 = vpop.f32.mrb[0].mxu0
        %v1794 = vadd.f32 %v1653, %v1793
        %v1795 = vpop.f32.mrb[0].mxu0
        %v1796 = vpop.f32.mrb[0].mxu0
        %v1797 = vadd.f32 %v1653, %v1796
        %v1798 = vpop.f32.mrb[0].mxu0
        %1799 = vmatprep.mubr.bf16.mxu0 %v1605
        %1800 = vmatmul.mubr.bf16.gmra.mrb[0].mxu0 %v1604
        %v1801 = vpop.f32.mrb[0].mxu0
        %v1802 = vadd.f32 %v1653, %v1801
        %v1803 = vpop.f32.mrb[0].mxu0
        %v1804 = vpop.f32.mrb[0].mxu0
        %v1805 = vadd.f32 %v1653, %v1804
        %v1806 = vpop.f32.mrb[0].mxu0
        %1807 = vmatprep.mubr.bf16.mxu0 %v1607
        %1808 = vmatmul.mubr.bf16.gmra.mrb[0].mxu0 %v1606
        %v1809 = vpop.f32.mrb[0].mxu0
        %v1810 = vadd.f32 %v1653, %v1809
        %v1811 = vpop.f32.mrb[0].mxu0
        %v1812 = vpop.f32.mrb[0].mxu0
        %v1813 = vadd.f32 %v1653, %v1812
        %v1814 = vpop.f32.mrb[0].mxu0
        %1815 = vmatprep.mubr.bf16.mxu0 %v1609
        %1816 = vmatmul.mubr.bf16.gmra.mrb[0].mxu0 %v1608
        %v1817 = vpop.f32.mrb[0].mxu0
        %v1818 = vadd.f32 %v1653, %v1817
        %v1819 = vpop.f32.mrb[0].mxu0
        %v1820 = vpop.f32.mrb[0].mxu0
        %v1821 = vadd.f32 %v1653, %v1820
        %v1822 = vpop.f32.mrb[0].mxu0
        %1823 = vmatprep.mubr.bf16.mxu0 %v1611
        %1824 = vmatmul.mubr.bf16.gmra.mrb[0].mxu0 %v1610
        %v1825 = vpop.f32.mrb[0].mxu0
        %v1826 = vadd.f32 %v1653, %v1825
        %v1827 = vpop.f32.mrb[0].mxu0
        %v1828 = vpop.f32.mrb[0].mxu0
        %v1829 = vadd.f32 %v1653, %v1828
        %v1830 = vpop.f32.mrb[0].mxu0
        %1831 = vmatprep.mubr.bf16.mxu0 %v1613
        %1832 = vmatmul.mubr.bf16.gmra.mrb[0].mxu0 %v1612
        %v1833 = vpop.f32.mrb[0].mxu0
        %v1834 = vadd.f32 %v1653, %v1833
        %v1835 = vpop.f32.mrb[0].mxu0
        %v1836 = vpop.f32.mrb[0].mxu0
        %v1837 = vadd.f32 %v1653, %v1836
        %v1838 = vpop.f32.mrb[0].mxu0
        %1839 = vmatprep.mubr.bf16.mxu0 %v1615
        %1840 = vmatmul.mubr.bf16.gmra.mrb[0].mxu0 %v1614
        %v1841 = vpop.f32.mrb[0].mxu0
        %v1842 = vadd.f32 %v1653, %v1841
        %v1843 = vpop.f32.mrb[0].mxu0
        %v1844 = vpop.f32.mrb[0].mxu0
        %v1845 = vadd.f32 %v1653, %v1844
        %v1846 = vpop.f32.mrb[0].mxu0
        %1847 = vdwg.mxu0
        %v1848 = vtanh.pop %v1786
        %v1849 = vtanh.pop %v1789
        %v1850 = vtanh.pop %v1794
        %v1851 = vtanh.pop %v1797
        %v1852 = vtanh.pop %v1802
        %v1853 = vtanh.pop %v1805
        %v1854 = vtanh.pop %v1810
        %v1855 = vtanh.pop %v1813
        %v1856 = vtanh.pop %v1818
        %v1857 = vtanh.pop %v1821
        %v1858 = vtanh.pop %v1826
        %v1859 = vtanh.pop %v1829
        %v1860 = vtanh.pop %v1834
        %v1861 = vtanh.pop %v1837
        %v1862 = vtanh.pop %v1842
        %v1863 = vtanh.pop %v1845
        %v1864 = vpack.c.bf16 %v1849, %v1848
        %v1865 = vpack.c.bf16 %v1851, %v1850
        %v1866 = vpack.c.bf16 %v1853, %v1852
        %v1867 = vpack.c.bf16 %v1855, %v1854
        %v1868 = vpack.c.bf16 %v1857, %v1856
        %v1869 = vpack.c.bf16 %v1859, %v1858
        %v1870 = vpack.c.bf16 %v1861, %v1860
        %v1871 = vpack.c.bf16 %v1863, %v1862
        %v1880 = vunpack.c.l.b16 %v1864
        %v1881 = vunpack.c.h.b16 %v1864
        %v1882 = vunpack.c.l.b16 %v1865
        %v1883 = vunpack.c.h.b16 %v1865
        %v1884 = vunpack.c.l.b16 %v1866
        %v1885 = vunpack.c.h.b16 %v1866
        %v1886 = vunpack.c.l.b16 %v1867
        %v1887 = vunpack.c.h.b16 %v1867
        %v1888 = vunpack.c.l.b16 %v1868
        %v1889 = vunpack.c.h.b16 %v1868
        %v1890 = vunpack.c.l.b16 %v1869
        %v1891 = vunpack.c.h.b16 %v1869
        %v1892 = vunpack.c.l.b16 %v1870
        %v1893 = vunpack.c.h.b16 %v1870
        %v1894 = vunpack.c.l.b16 %v1871
        %v1895 = vunpack.c.h.b16 %v1871
        %v1896 = vpack.c.b16 %v1880, %v1880
        %v1897 = vpack.c.b16 %v1881, %v1881
        %v1898 = vpack.c.b16 %v1882, %v1882
        %v1899 = vpack.c.b16 %v1883, %v1883
        %v1900 = vpack.c.b16 %v1884, %v1884
        %v1901 = vpack.c.b16 %v1885, %v1885
        %v1902 = vpack.c.b16 %v1886, %v1886
        %v1903 = vpack.c.b16 %v1887, %v1887
        %v1904 = vpack.c.b16 %v1888, %v1888
        %v1905 = vpack.c.b16 %v1889, %v1889
        %v1906 = vpack.c.b16 %v1890, %v1890
        %v1907 = vpack.c.b16 %v1891, %v1891
        %v1908 = vpack.c.b16 %v1892, %v1892
        %v1909 = vpack.c.b16 %v1893, %v1893
        %v1910 = vpack.c.b16 %v1894, %v1894
        %v1911 = vpack.c.b16 %v1895, %v1895
        %1928 = vst [vmem:[%s295] sm:$0xf] %v1896
        %1929 = vst [vmem:[%s295 + $0x4] sm:$0xf] %v1897
        %1930 = vst [vmem:[%s295 + $0x8] sm:$0xf] %v1898
        %1931 = vst [vmem:[%s295 + $0xc] sm:$0xf] %v1899
        %1932 = vst [vmem:[%s295 + $0x10] sm:$0xf] %v1900
        %1933 = vst [vmem:[%s295 + $0x14] sm:$0xf] %v1901
        %1934 = vst [vmem:[%s295 + $0x18] sm:$0xf] %v1902
        %1935 = vst [vmem:[%s295 + $0x1c] sm:$0xf] %v1903
        %1936 = vst [vmem:[%s295 + $0x20] sm:$0xf] %v1904
        %1937 = vst [vmem:[%s295 + $0x24] sm:$0xf] %v1905
        %1938 = vst [vmem:[%s295 + $0x28] sm:$0xf] %v1906
        %1939 = vst [vmem:[%s295 + $0x2c] sm:$0xf] %v1907
        %1940 = vst [vmem:[%s295 + $0x30] sm:$0xf] %v1908
        %1941 = vst [vmem:[%s295 + $0x34] sm:$0xf] %v1909
        %1942 = vst [vmem:[%s295 + $0x38] sm:$0xf] %v1910
        %1943 = vst [vmem:[%s295 + $0x3c] sm:$0xf] %v1911
        %s1944 = smul.u32 16, %s19
        %p1945 = scmp.lt.s32.totalorder %s1944, 31
        %s1946 = scalar_select %p1945, %s1944, 31
        %s1947 = smul.addr %s1946, 4
        %s1948 = scalar_lea.vmem %s7, %s1947
        // Predicated region
        $region53: #{_policy_pallas.1} parent=47 // pred_check
          %p1949 = pneg %p189
        $region54: #{_policy_pallas.1} parent=47 // pred_check_branch
          %1951 = sbr.rel (%p1949) target = $region56
        $region55: #{_policy_pallas.1} parent=47 // pred_region
          %s1952 = smul.u32 16, %s19
        $region56: #{_policy_pallas.1} parent=47 // pred_fallthru
          _
      $region48: #{_policy_pallas.1} parent=5 // pred_fallthru
        _
      %p1953 = scmp.le.s32.totalorder 2, %s14
      // Predicated region
      $region57: #{_policy_pallas.1} parent=5 // pred_check
        %p1954 = pneg %p1953
      $region58: #{_policy_pallas.1} parent=5 // pred_check_branch
        %1956 = sbr.rel (%p1954) target = $region60
      $region59: #{_policy_pallas.1} parent=5 // pred_region
        %s1957 = ssub.s32 %s14, 2
        // Predicated region
        $region61: #{_policy_pallas.1} parent=59 // pred_check
          %p1958 = pneg %p195
        $region62: #{_policy_pallas.1} parent=59 // pred_check_branch
          %1960 = sbr.rel (%p1958) target = $region64
        $region63: #{_policy_pallas.1} parent=59 // pred_region
          %s1961 = smul.u32 16, %s20
          %p1962 = scmp.lt.s32.totalorder %s1961, 31
          %s1963 = scalar_select %p1962, %s1961, 31
          %s1964 = smul.addr %s1963, 4
          %s1965 = scalar_lea.vmem %s7, %s1964
        $region64: #{_policy_pallas.1} parent=59 // pred_fallthru
          _
      $region60: #{_policy_pallas.1} parent=5 // pred_fallthru
        _
    $region6: #{_policy_pallas.1} parent=1 // loop_footer
      %s18 = sadd.s32 1, %s14
    $region7: #{_policy_pallas.1} parent=1 // loop_footer_branch
      %13 = sbr.rel target = $region3
    $region8: #{_policy_pallas.1} parent=1 // loop_exit
      _
    %1966 = vsyncpa [#allocation3], 1
    %s1967 = scalar_lea.sflag [#allocation3], 1
    %1968 = vsyncpa %s1967, 1

</llo_original>
